<compile_context>
chip_gen: v7x
topology: tpu7x:2x2x1
jax: 0.10.0
libtpu: 0.0.40
codegen_flags: <defaults>
</compile_context>

<pallas_src>
import jax
import jax.numpy as jnp
from jax.experimental import pallas as pl
from jax.experimental.pallas import tpu as pltpu

N_SAMPLES = 2 ** 17  # torch truncates audio to this length; small shapes never reach it


# ---------------------------------------------------------------------------
# constant-matrix builders (run once in the wrapper, outside the kernel)
# ---------------------------------------------------------------------------

def _hann_window(window_size):
    n = jnp.arange(window_size, dtype=jnp.float32)
    return 0.5 - 0.5 * jnp.cos(2.0 * jnp.pi * n / window_size)


def _irfft_ortho_basis(window_size):
    """Rows interleaved [re_0, im_0, re_1, im_1, ...] -> (2*n_coeffs, N)."""
    N = window_size
    n_coeffs = N // 2 + 1
    k = jnp.arange(n_coeffs, dtype=jnp.float32)[:, None]
    n = jnp.arange(N, dtype=jnp.float32)[None, :]
    ang = 2.0 * jnp.pi * k * n / N
    kk = jnp.arange(n_coeffs)
    w = jnp.where((kk == 0) | (kk == N // 2), 1.0, 2.0).astype(jnp.float32)
    scale = w[:, None] / jnp.sqrt(jnp.float32(N))
    re_rows = jnp.cos(ang) * scale
    im_rows = -jnp.sin(ang) * scale
    return jnp.stack([re_rows, im_rows], axis=1).reshape(2 * n_coeffs, N)


def _decay_toeplitz(d, frames):
    """toep[c, k, t] = (1e-12 + d_c)**(t-k+1) for t >= k else 0 (exponent masked
    before exp for overflow robustness)."""
    T = frames
    logd = jnp.log(1e-12 + d)                                     # (C,)
    k = jnp.arange(T)[:, None]
    t = jnp.arange(T)[None, :]
    causal = t >= k
    expo = jnp.where(causal, (t - k + 1), 0).astype(jnp.float32)  # (T, T)
    toep = jnp.exp(expo[None, :, :] * logd[:, None, None])        # (C, T, T)
    return jnp.where(causal[None, :, :], toep, 0.0)


# ---------------------------------------------------------------------------
# kernel: two lane-dense matmuls + relu / tanh
# ---------------------------------------------------------------------------

def _block_kernel(cp_ref, m1_ref, ob_ref, audio_ref, cp_out_ref):
    hi = jax.lax.Precision.HIGHEST
    x_in = jnp.maximum(cp_ref[...], 0.0)                               # relu(cp), (Bb, F)
    # folded: mapping @ cp -> fft_convolve(decays) -> out_mapping + residual -> * gains
    cp_out = jnp.tanh(jnp.dot(x_in, m1_ref[...],
                              preferred_element_type=jnp.float32, precision=hi))
    cp_out_ref[...] = cp_out
    # folded: audio_mapping -> irfft(ortho) -> Hann window -> 50% overlap-add
    # (ob is zero-padded to 128 lanes so the store is a full, unmasked vst)
    audio_ref[...] = jnp.dot(cp_out, ob_ref[...],
                             preferred_element_type=jnp.float32, precision=hi)


# ---------------------------------------------------------------------------
# wrapper
# ---------------------------------------------------------------------------

def make_block_params(key, block_size, window_size):
    n_coeffs = window_size // 2 + 1
    total_coeffs = n_coeffs * 2
    k1, k2, k3, k4, k5 = jax.random.split(key, 5)
    return dict(
        w1=jax.random.uniform(k1, (block_size, block_size), jnp.float32, -0.01, 0.01),
        w2=jax.random.uniform(k2, (block_size, block_size), jnp.float32, -0.01, 0.01),
        audio=jax.random.uniform(k3, (total_coeffs, block_size), jnp.float32, -0.01, 0.01),
        decays=jax.random.uniform(k4, (block_size,), jnp.float32, 0.001, 0.99),
        gains=jax.random.uniform(k5, (block_size,), jnp.float32, -3.0, 3.0),
    )


def block_forward(cp, params, *, block_size, window_size,
                  base_resonance=0.5, max_gain=5.0, batch_block=256):
    f32 = jnp.float32
    hi = jax.lax.Precision.HIGHEST
    B, C, T = cp.shape
    assert C == block_size
    W = window_size
    hop = W // 2
    F = C * T                                  # flattened control-plane width per batch row
    A = (T + 1) * hop                          # folded overlap-add audio samples per batch row
    A_pad = max(128, ((A + 127) // 128) * 128)  # lane-dense audio writeback

    # --- hoisted parameter nonlinearities (constant across the grid) ---
    d = base_resonance + jax.nn.sigmoid(params['decays'].astype(f32)) * (1.0 - base_resonance)
    g = jax.nn.sigmoid(params['gains'].astype(f32)) * max_gain
    w1 = params['w1'].astype(f32)
    w2 = params['w2'].astype(f32)
    amap = params['audio'].astype(f32)

    # --- fold all constant structure into two matrices ---
    eye_t = jnp.eye(T, dtype=f32)
    # x[b, c*T+t] = sum_d cp[b, d*T+t] * w1[c, d]
    w1_big = jnp.einsum('cd,tu->dtcu', w1, eye_t).reshape(F, F)
    # conv part: Q[c*T+k, e*T+t] = w2[e,c] * toep[c,k,t]
    toep = _decay_toeplitz(d, T)                                       # (C, T, T)
    q_big = jnp.einsum('ec,ckt->cket', w2, toep).reshape(F, F)
    # gains broadcast over frames, matching the (c, t) flat column order
    g_big = jnp.repeat(g, T).reshape(1, F)
    # single fused pre/post matrix: z = relu(cp) @ W1big @ (Qbig + I); cp_out = tanh(z * g)
    m1 = jnp.dot(w1_big, q_big + jnp.eye(F, dtype=f32), precision=hi) * g_big   # (F, F)

    # spectral synthesis fold: M[c, w] = (amap^T @ irfft_basis)[c, w] * hann[w]
    basis = _irfft_ortho_basis(W)                                      # (2*n_coeffs, W)
    m_syn = jnp.einsum('kc,kw->cw', amap, basis, precision=hi) * _hann_window(W)[None, :]
    # fold the 50% overlap-add too:
    #   audio[b, r*hop+j] = sum_c cp_out[b,c,r]*M[c,j] + sum_c cp_out[b,c,r-1]*M[c,hop+j]
    d1 = jnp.concatenate([eye_t, jnp.zeros((T, 1), f32)], axis=1)      # delta(t, r),   r <  T
    d2 = jnp.concatenate([jnp.zeros((T, 1), f32), eye_t], axis=1)      # delta(t, r-1), r >= 1
    o_big = (jnp.einsum('cj,tr->ctrj', m_syn[:, :hop], d1)
             + jnp.einsum('cj,tr->ctrj', m_syn[:, hop:], d2)).reshape(F, A)
    o_big_pad = jnp.pad(o_big, ((0, 0), (0, A_pad - A)))               # zero lanes 72..127

    # --- batch tiling: one big tile for small B, large MXU-filling tiles otherwise ---
    Bb = int(min(batch_block, max(8, ((B + 7) // 8) * 8)))
    B_pad = ((B + Bb - 1) // Bb) * Bb
    cp_flat = cp.astype(f32).reshape(B, F)
    if B_pad != B:
        cp_flat = jnp.pad(cp_flat, ((0, B_pad - B), (0, 0)))
    grid = (B_pad // Bb,)

    cost = pl.CostEstimate(
        flops=2 * B_pad * F * (F + A_pad),
        transcendentals=B_pad * F,
        bytes_accessed=4 * (B_pad * (2 * F + A_pad) + F * F + F * A_pad),
    )

    audio_pad, cp_out_flat = pl.pallas_call(
        _block_kernel,
        out_shape=(jax.ShapeDtypeStruct((B_pad, A_pad), f32),
                   jax.ShapeDtypeStruct((B_pad, F), f32)),
        grid_spec=pltpu.PrefetchScalarGridSpec(
            num_scalar_prefetch=0,
            grid=grid,
            in_specs=[
                pl.BlockSpec((Bb, F), lambda i: (i, 0)),       # cp, flattened, lane-dense
                pl.BlockSpec((F, F), lambda i: (0, 0)),        # fused pre/post matrix (const)
                pl.BlockSpec((F, A_pad), lambda i: (0, 0)),    # folded synthesis+OLA (const)
            ],
            out_specs=[
                pl.BlockSpec((Bb, A_pad), lambda i: (i, 0)),   # padded audio (lane-dense store)
                pl.BlockSpec((Bb, F), lambda i: (i, 0)),       # control-plane out
            ],
        ),
        compiler_params=pltpu.CompilerParams(
            dimension_semantics=("parallel",),
            vmem_limit_bytes=32 * 1024 * 1024,
        ),
        cost_estimate=cost,
    )(cp_flat, m1, o_big_pad)

    audio = audio_pad[:B, :A].reshape(B, 1, A)[..., :N_SAMPLES]   # truncation is a no-op here
    cp_out = cp_out_flat[:B].reshape(B, C, T)
    return audio, cp_out


# ---------------------------------------------------------------------------
# pure-JAX reference (unfolded math) for correctness checking
# ---------------------------------------------------------------------------

def reference_forward(cp, params, *, block_size, window_size,
                      base_resonance=0.5, max_gain=5.0):
    f32 = jnp.float32
    hi = jax.lax.Precision.HIGHEST
    B, C, T = cp.shape
    W = window_size
    hop = W // 2
    d = base_resonance + jax.nn.sigmoid(params['decays'].astype(f32)) * (1.0 - base_resonance)
    g = jax.nn.sigmoid(params['gains'].astype(f32)) * max_gain
    x_in = jnp.maximum(cp.astype(f32), 0.0)
    x = jnp.einsum('cd,bdt->bct', params['w1'].astype(f32), x_in, precision=hi)
    orig = x
    toep = _decay_toeplitz(d, T)
    y = jnp.einsum('bck,ckt->bct', x, toep, precision=hi)
    x2 = jnp.einsum('ec,bct->bet', params['w2'].astype(f32), y, precision=hi) + orig
    cp_out = jnp.tanh(x2 * g[None, :, None])
    spec = jnp.einsum('kc,bct->bkt', params['audio'].astype(f32), cp_out, precision=hi)
    frames = jnp.einsum('bkt,kw->btw', spec, _irfft_ortho_basis(W), precision=hi)
    windowed = frames * _hann_window(W)[None, None, :]
    zero = jnp.zeros((B, 1, hop), f32)
    audio_fold = (jnp.concatenate([windowed[:, :, :hop], zero], axis=1)
                  + jnp.concatenate([zero, windowed[:, :, hop:]], axis=1))
    audio = audio_fold.reshape(B, 1, (T + 1) * hop)[..., :N_SAMPLES]
    return audio, cp_out


if __name__ == "__main__":
    block_size = 16
    window_size = 16
    frames = 8
    batch = 32   # single grid step of 32 -> lane-dense (32, 128) tiles, no pipeline overhead

    key = jax.random.PRNGKey(0)
    pkey, xkey = jax.random.split(key)
    params = make_block_params(pkey, block_size, window_size)
    cp = jax.random.normal(xkey, (batch, block_size, frames), jnp.float32)

    audio, cp_out = block_forward(cp, params, block_size=block_size,
                                  window_size=window_size)
    jax.block_until_ready((audio, cp_out))

    assert audio.shape == (batch, 1, (frames + 1) * (window_size // 2))
    assert cp_out.shape == (batch, block_size, frames)

    audio_ref, cp_ref = reference_forward(cp, params, block_size=block_size,
                                          window_size=window_size)
    assert bool(jnp.allclose(cp_out, cp_ref, rtol=1e-3, atol=1e-5)), \
        float(jnp.max(jnp.abs(cp_out - cp_ref)))
    assert bool(jnp.allclose(audio, audio_ref, rtol=1e-3, atol=1e-5)), \
        float(jnp.max(jnp.abs(audio - audio_ref)))
    print("KERNEL_OK")
</pallas_src>

<mosaic_0001>
module attributes {stable_mosaic.version = 11 : i64} {
  func.func @_block_kernel(%arg0: i32, %arg1: memref<32x128xf32, #tpu.memory_space<vmem>>, %arg2: memref<128x128xf32, #tpu.memory_space<vmem>>, %arg3: memref<128x128xf32, #tpu.memory_space<vmem>>, %arg4: memref<32x128xf32, #tpu.memory_space<vmem>>, %arg5: memref<32x128xf32, #tpu.memory_space<vmem>>) attributes {dimension_semantics = [#tpu.dimension_semantics<parallel>], iteration_bounds = array<i64: 1>, scalar_prefetch = 0 : i64, scratch_operands = 0 : i64, tpu.core_type = #tpu.core_type<tc>, window_params = [{transform_indices = @transform_0, window_bounds = array<i64: 32, 128>}, {pipeline_mode = #tpu.pipeline_mode<synchronous>, transform_indices = @transform_1, window_bounds = array<i64: 128, 128>}, {pipeline_mode = #tpu.pipeline_mode<synchronous>, transform_indices = @transform_2, window_bounds = array<i64: 128, 128>}, {transform_indices = @transform_3, window_bounds = array<i64: 32, 128>}, {transform_indices = @transform_4, window_bounds = array<i64: 32, 128>}]} {
    %c0 = arith.constant 0 : index
    %c0_0 = arith.constant 0 : index
    %0 = vector.load %arg1[%c0, %c0_0] : memref<32x128xf32, #tpu.memory_space<vmem>>, vector<32x128xf32>
    %cst = arith.constant 0.000000e+00 : f32
    %1 = vector.broadcast %cst : f32 to vector<32x128xf32>
    %2 = arith.maximumf %0, %1 : vector<32x128xf32>
    %c0_1 = arith.constant 0 : index
    %c0_2 = arith.constant 0 : index
    %3 = vector.load %arg2[%c0_1, %c0_2] : memref<128x128xf32, #tpu.memory_space<vmem>>, vector<128x128xf32>
    %cst_3 = arith.constant dense<0.000000e+00> : vector<32x128xf32>
    %4 = tpu.matmul %2, %3, %cst_3 {dimension_numbers = #tpu.dot_dimension_numbers<[1], [0], [0], [1], [0, 0, 1, 1], [], []>, precision = #tpu.contract_precision<fp32>} : vector<32x128xf32>, vector<128x128xf32>, vector<32x128xf32> -> vector<32x128xf32>
    %5 = math.tanh %4 : vector<32x128xf32>
    %c0_4 = arith.constant 0 : index
    %c0_5 = arith.constant 0 : index
    %6 = vector.load %arg5[%c0_4, %c0_5] : memref<32x128xf32, #tpu.memory_space<vmem>>, vector<32x128xf32>
    tpu.vector_store %arg5[%c0_4, %c0_5], %5 {strides = array<i32>} : memref<32x128xf32, #tpu.memory_space<vmem>>, vector<32x128xf32>,
    %c0_6 = arith.constant 0 : index
    %c0_7 = arith.constant 0 : index
    %7 = vector.load %arg3[%c0_6, %c0_7] : memref<128x128xf32, #tpu.memory_space<vmem>>, vector<128x128xf32>
    %cst_8 = arith.constant dense<0.000000e+00> : vector<32x128xf32>
    %8 = tpu.matmul %5, %7, %cst_8 {dimension_numbers = #tpu.dot_dimension_numbers<[1], [0], [0], [1], [0, 0, 1, 1], [], []>, precision = #tpu.contract_precision<fp32>} : vector<32x128xf32>, vector<128x128xf32>, vector<32x128xf32> -> vector<32x128xf32>
    %c0_9 = arith.constant 0 : index
    %c0_10 = arith.constant 0 : index
    %9 = vector.load %arg4[%c0_9, %c0_10] : memref<32x128xf32, #tpu.memory_space<vmem>>, vector<32x128xf32>
    tpu.vector_store %arg4[%c0_9, %c0_10], %8 {strides = array<i32>} : memref<32x128xf32, #tpu.memory_space<vmem>>, vector<32x128xf32>,
    return
  }
  func.func @transform_0(%arg0: i32) -> (i32, i32) {
    %c0_i32 = arith.constant 0 : i32
    %c0_i32_0 = arith.constant 0 : i32
    return %arg0, %c0_i32 : i32, i32
  }
  func.func @transform_1(%arg0: i32) -> (i32, i32) {
    %c0_i32 = arith.constant 0 : i32
    %c0_i32_0 = arith.constant 0 : i32
    %c0_i32_1 = arith.constant 0 : i32
    return %c0_i32, %c0_i32_0 : i32, i32
  }
  func.func @transform_2(%arg0: i32) -> (i32, i32) {
    %c0_i32 = arith.constant 0 : i32
    %c0_i32_0 = arith.constant 0 : i32
    %c0_i32_1 = arith.constant 0 : i32
    return %c0_i32, %c0_i32_0 : i32, i32
  }
  func.func @transform_3(%arg0: i32) -> (i32, i32) {
    %c0_i32 = arith.constant 0 : i32
    %c0_i32_0 = arith.constant 0 : i32
    return %arg0, %c0_i32 : i32, i32
  }
  func.func @transform_4(%arg0: i32) -> (i32, i32) {
    %c0_i32 = arith.constant 0 : i32
    %c0_i32_0 = arith.constant 0 : i32
    return %arg0, %c0_i32 : i32, i32
  }
}

</mosaic_0001>

<llo_original>
// kernel: tpu_custom_call.1
$region0: #{tpu_custom_call.1}
  #allocation0 [shape = 'u32[]', space=smem, size = 0x4, offset = 0x4, fixed_abs, tag = 'smem constant byte address 0x4 - core index']
  #allocation1 [shape = 'u32[144,128]{1,0:T(1,128)}', space=vmem, size = 0x12000, scoped, tag = 'internal scratch']
  %s0 = inlined_call_operand.hbm [shape: f32[32,128], index: 0, kind: input, shape index: {}]
  %s1 = inlined_call_operand.hbm [shape: f32[128,128], index: 1, kind: input, shape index: {}]
  %s2 = inlined_call_operand.hbm [shape: f32[128,128], index: 2, kind: input, shape index: {}]
  %s3 = inlined_call_operand.hbm [shape: f32[32,128], index: 3, kind: output, shape index: {0}]
  %s4 = inlined_call_operand.hbm [shape: f32[32,128], index: 4, kind: output, shape index: {1}]
  %5 = xla_tuple %s3, %s4
  %s6 = sld [smem:[#allocation0]]
  $region42: #{tpu_custom_call.1} parent=0
    _
  %s8 = ssub.s32 1, %s6
  %s9 = scalar_select 0, %s8, %s6
  $region1: #{tpu_custom_call.1} parent=0
    #allocation2 [shape = 'u8[16384]{0}', space=vmem, size = 0x4000, scoped, tag = 'input window, operand 0, single buffered']
    #allocation3 [shape = 's32[1]{0}', space=sflag, size = 0x4, scoped, tag = 'scoped memory for tpu_custom_call.1']
    #allocation4 [shape = 's32[1]{0}', space=sflag, size = 0x4, scoped, tag = 'scoped memory for tpu_custom_call.1']
    #allocation5 [shape = 'u8[65536]{0}', space=vmem, size = 0x10000, scoped, tag = 'input window, operand 1, single buffered']
    #allocation6 [shape = 's32[1]{0}', space=sflag, size = 0x4, scoped, tag = 'scoped memory for tpu_custom_call.1']
    #allocation7 [shape = 'u8[65536]{0}', space=vmem, size = 0x10000, scoped, tag = 'input window, operand 2, single buffered']
    #allocation8 [shape = 'u8[16384]{0}', space=vmem, size = 0x4000, scoped, tag = 'output window, operand 0, single buffered']
    #allocation9 [shape = 'u8[16384]{0}', space=vmem, size = 0x4000, scoped, tag = 'output window, operand 1, single buffered']
    #allocation10 [shape = 's32[1]{0}', space=sflag, size = 0x4, scoped, tag = 'scoped memory for tpu_custom_call.1']
    %10 = vsyncpa [#allocation3], 0
    %11 = vsyncpa [#allocation6], 0
    %12 = vsyncpa [#allocation4], 0
    %13 = vsyncpa [#allocation10], 0
    // Predicated region
    $region2: #{tpu_custom_call.1} parent=1 // pred_check
      _
    $region3: #{tpu_custom_call.1} parent=1 // pred_check_branch
      %15 = sbr.rel (0) target = $region5
    $region4: #{tpu_custom_call.1} parent=1 // pred_region
      %s17 = ssub.s32 512, 512
      %18 = vsyncadd [#allocation3], %s17
      %s19 = sshll.u32 [#allocation2], 4
      %s20 = int_to_ptr.vmem [resolvable:$true] %s19
      %25 = dma.hbm_to_vmem [thread:$0]  %s0, 512, %s20, [#allocation3], 128, 128, 8
    $region5: #{tpu_custom_call.1} parent=1 // pred_fallthru
      _
    // Predicated region
    $region6: #{tpu_custom_call.1} parent=1 // pred_check
      _
    $region7: #{tpu_custom_call.1} parent=1 // pred_check_branch
      %27 = sbr.rel (0) target = $region9
    $region8: #{tpu_custom_call.1} parent=1 // pred_region
      %s29 = ssub.s32 2048, 2048
      %30 = vsyncadd [#allocation6], %s29
      %s31 = sshll.u32 [#allocation5], 4
      %s32 = int_to_ptr.vmem [resolvable:$true] %s31
      %37 = dma.hbm_to_vmem [thread:$0]  %s1, 2048, %s32, [#allocation6], 128, 128, 8
    $region9: #{tpu_custom_call.1} parent=1 // pred_fallthru
      _
    // Predicated region
    $region10: #{tpu_custom_call.1} parent=1 // pred_check
      _
    $region11: #{tpu_custom_call.1} parent=1 // pred_check_branch
      %39 = sbr.rel (0) target = $region13
    $region12: #{tpu_custom_call.1} parent=1 // pred_region
      %s41 = ssub.s32 2048, 2048
      %42 = vsyncadd [#allocation6], %s41
      %s43 = sshll.u32 [#allocation7], 4
      %s44 = int_to_ptr.vmem [resolvable:$true] %s43
      %49 = dma.hbm_to_vmem [thread:$0]  %s2, 2048, %s44, [#allocation6], 128, 128, 8
    $region13: #{tpu_custom_call.1} parent=1 // pred_fallthru
      _
    // Predicated region
    $region14: #{tpu_custom_call.1} parent=1 // pred_check
      _
    $region15: #{tpu_custom_call.1} parent=1 // pred_check_branch
      %51 = sbr.rel (0) target = $region17
    $region16: #{tpu_custom_call.1} parent=1 // pred_region
      %52 = dma.done [#allocation3], 512
    $region17: #{tpu_custom_call.1} parent=1 // pred_fallthru
      _
    // Predicated region
    $region18: #{tpu_custom_call.1} parent=1 // pred_check
      _
    $region19: #{tpu_custom_call.1} parent=1 // pred_check_branch
      %54 = sbr.rel (0) target = $region21
    $region20: #{tpu_custom_call.1} parent=1 // pred_region
      %55 = dma.done [#allocation6], 2048
    $region21: #{tpu_custom_call.1} parent=1 // pred_fallthru
      _
    // Predicated region
    $region22: #{tpu_custom_call.1} parent=1 // pred_check
      _
    $region23: #{tpu_custom_call.1} parent=1 // pred_check_branch
      %57 = sbr.rel (0) target = $region25
    $region24: #{tpu_custom_call.1} parent=1 // pred_region
      %58 = dma.done [#allocation6], 2048
    $region25: #{tpu_custom_call.1} parent=1 // pred_fallthru
      _
    %v59 = vld [vmem:[#allocation2] sm:$0xff]
    %v60 = vld [vmem:[#allocation2 + $0x8] sm:$0xff]
    %v61 = vld [vmem:[#allocation2 + $0x10] sm:$0xff]
    %v62 = vld [vmem:[#allocation2 + $0x18] sm:$0xff]
    %v63 = vmax.f32 %v59, 0.0
    %v64 = vmax.f32 %v60, 0.0
    %v65 = vmax.f32 %v61, 0.0
    %v66 = vmax.f32 %v62, 0.0
    %v67 = vld [vmem:[#allocation5] sm:$0xff]
    %v68 = vld [vmem:[#allocation5 + $0x8] sm:$0xff]
    %v69 = vld [vmem:[#allocation5 + $0x10] sm:$0xff]
    %v70 = vld [vmem:[#allocation5 + $0x18] sm:$0xff]
    %v71 = vld [vmem:[#allocation5 + $0x20] sm:$0xff]
    %v72 = vld [vmem:[#allocation5 + $0x28] sm:$0xff]
    %v73 = vld [vmem:[#allocation5 + $0x30] sm:$0xff]
    %v74 = vld [vmem:[#allocation5 + $0x38] sm:$0xff]
    %v75 = vld [vmem:[#allocation5 + $0x40] sm:$0xff]
    %v76 = vld [vmem:[#allocation5 + $0x48] sm:$0xff]
    %v77 = vld [vmem:[#allocation5 + $0x50] sm:$0xff]
    %v78 = vld [vmem:[#allocation5 + $0x58] sm:$0xff]
    %v79 = vld [vmem:[#allocation5 + $0x60] sm:$0xff]
    %v80 = vld [vmem:[#allocation5 + $0x68] sm:$0xff]
    %v81 = vld [vmem:[#allocation5 + $0x70] sm:$0xff]
    %v82 = vld [vmem:[#allocation5 + $0x78] sm:$0xff]
    %83 = vmatprep.subr.mxu0 0.0
    %v84 = vand.u32 %v67, 4294901760
    %85 = vmatpush1.msra.mxu0 %v84
    %86 = vmatprep.subr.mxu0 0.0
    %v87 = vand.u32 %v68, 4294901760
    %88 = vmatpush1.msra.mxu0 %v87
    %89 = vmatprep.subr.mxu0 0.0
    %v90 = vand.u32 %v69, 4294901760
    %91 = vmatpush1.msra.mxu0 %v90
    %92 = vmatprep.subr.mxu0 0.0
    %v93 = vand.u32 %v70, 4294901760
    %94 = vmatpush1.msra.mxu0 %v93
    %95 = vmatprep.subr.mxu0 0.0
    %v96 = vand.u32 %v71, 4294901760
    %97 = vmatpush1.msra.mxu0 %v96
    %98 = vmatprep.subr.mxu0 0.0
    %v99 = vand.u32 %v72, 4294901760
    %100 = vmatpush1.msra.mxu0 %v99
    %101 = vmatprep.subr.mxu0 0.0
    %v102 = vand.u32 %v73, 4294901760
    %103 = vmatpush1.msra.mxu0 %v102
    %104 = vmatprep.subr.mxu0 0.0
    %v105 = vand.u32 %v74, 4294901760
    %106 = vmatpush1.msra.mxu0 %v105
    %107 = vmatprep.subr.mxu0 0.0
    %v108 = vand.u32 %v75, 4294901760
    %109 = vmatpush1.msra.mxu0 %v108
    %110 = vmatprep.subr.mxu0 0.0
    %v111 = vand.u32 %v76, 4294901760
    %112 = vmatpush1.msra.mxu0 %v111
    %113 = vmatprep.subr.mxu0 0.0
    %v114 = vand.u32 %v77, 4294901760
    %115 = vmatpush1.msra.mxu0 %v114
    %116 = vmatprep.subr.mxu0 0.0
    %v117 = vand.u32 %v78, 4294901760
    %118 = vmatpush1.msra.mxu0 %v117
    %119 = vmatprep.subr.mxu0 0.0
    %v120 = vand.u32 %v79, 4294901760
    %121 = vmatpush1.msra.mxu0 %v120
    %122 = vmatprep.subr.mxu0 0.0
    %v123 = vand.u32 %v80, 4294901760
    %124 = vmatpush1.msra.mxu0 %v123
    %125 = vmatprep.subr.mxu0 0.0
    %v126 = vand.u32 %v81, 4294901760
    %127 = vmatpush1.msra.mxu0 %v126
    %128 = vmatprep.subr.mxu0 0.0
    %v129 = vand.u32 %v82, 4294901760
    %130 = vmatpush1.msra.mxu0 %v129
    %131 = vmatprep.subr.mxu0 0.0
    %132 = vmatpush1.msra.mxu0 0.0
    %133 = vmatprep.subr.mxu0 0.0
    %134 = vmatpush1.msra.mxu0 0.0
    %135 = vmatprep.subr.mxu0 0.0
    %136 = vmatpush1.msra.mxu0 0.0
    %137 = vmatprep.subr.mxu0 0.0
    %138 = vmatpush1.msra.mxu0 0.0
    %139 = vmatprep.subr.mxu0 0.0
    %140 = vmatpush1.msra.mxu0 0.0
    %141 = vmatprep.subr.mxu0 0.0
    %142 = vmatpush1.msra.mxu0 0.0
    %143 = vmatprep.subr.mxu0 0.0
    %144 = vmatpush1.msra.mxu0 0.0
    %145 = vmatprep.subr.mxu0 0.0
    %146 = vmatpush1.msra.mxu0 0.0
    %147 = vmatprep.subr.mxu0 0.0
    %148 = vmatpush1.msra.mxu0 0.0
    %149 = vmatprep.subr.mxu0 0.0
    %150 = vmatpush1.msra.mxu0 0.0
    %151 = vmatprep.subr.mxu0 0.0
    %152 = vmatpush1.msra.mxu0 0.0
    %153 = vmatprep.subr.mxu0 0.0
    %154 = vmatpush1.msra.mxu0 0.0
    %155 = vmatprep.subr.mxu0 0.0
    %156 = vmatpush1.msra.mxu0 0.0
    %157 = vmatprep.subr.mxu0 0.0
    %158 = vmatpush1.msra.mxu0 0.0
    %159 = vmatprep.subr.mxu0 0.0
    %160 = vmatpush1.msra.mxu0 0.0
    %161 = vmatprep.subr.mxu0 0.0
    %162 = vmatpush1.msra.mxu0 0.0
    %163 = vmatprep.mubr.f32.mxu0 0.0
    %v164 = vand.u32 %v63, 4294901760
    %v165 = vsub.f32 %v63, %v164
    %v166 = vand.u32 %v165, 4294901760
    %v167 = vsub.f32 %v165, %v166
    %v168 = vand.u32 %v167, 4294901760
    %169 = vmatmul.mubr.f32.gmra.mrb[0].mxu0 %v168
    %v170 = vpop.f32.mrb[0].mxu0
    %v171 = vadd.f32 0.0, %v170
    %v172 = vpop.f32.mrb[0].mxu0
    %173 = vmatprep.mubr.f32.mxu0 0.0
    %v174 = vand.u32 %v64, 4294901760
    %v175 = vsub.f32 %v64, %v174
    %v176 = vand.u32 %v175, 4294901760
    %v177 = vsub.f32 %v175, %v176
    %v178 = vand.u32 %v177, 4294901760
    %179 = vmatmul.mubr.f32.gmra.mrb[0].mxu0 %v178
    %v180 = vpop.f32.mrb[0].mxu0
    %v181 = vadd.f32 0.0, %v180
    %v182 = vpop.f32.mrb[0].mxu0
    %183 = vmatprep.mubr.f32.mxu0 0.0
    %v184 = vand.u32 %v65, 4294901760
    %v185 = vsub.f32 %v65, %v184
    %v186 = vand.u32 %v185, 4294901760
    %v187 = vsub.f32 %v185, %v186
    %v188 = vand.u32 %v187, 4294901760
    %189 = vmatmul.mubr.f32.gmra.mrb[0].mxu0 %v188
    %v190 = vpop.f32.mrb[0].mxu0
    %v191 = vadd.f32 0.0, %v190
    %v192 = vpop.f32.mrb[0].mxu0
    %193 = vmatprep.mubr.f32.mxu0 0.0
    %v194 = vand.u32 %v66, 4294901760
    %v195 = vsub.f32 %v66, %v194
    %v196 = vand.u32 %v195, 4294901760
    %v197 = vsub.f32 %v195, %v196
    %v198 = vand.u32 %v197, 4294901760
    %199 = vmatmul.mubr.f32.gmra.mrb[0].mxu0 %v198
    %v200 = vpop.f32.mrb[0].mxu0
    %v201 = vadd.f32 0.0, %v200
    %v202 = vpop.f32.mrb[0].mxu0
    %203 = vdwg.mxu0
    %204 = vmatprep.subr.mxu0 0.0
    %v205 = vand.u32 %v67, 4294901760
    %v206 = vsub.f32 %v67, %v205
    %v207 = vand.u32 %v206, 4294901760
    %v208 = vsub.f32 %v206, %v207
    %v209 = vand.u32 %v208, 4294901760
    %210 = vmatpush1.msra.mxu0 %v209
    %211 = vmatprep.subr.mxu0 0.0
    %v212 = vand.u32 %v68, 4294901760
    %v213 = vsub.f32 %v68, %v212
    %v214 = vand.u32 %v213, 4294901760
    %v215 = vsub.f32 %v213, %v214
    %v216 = vand.u32 %v215, 4294901760
    %217 = vmatpush1.msra.mxu0 %v216
    %218 = vmatprep.subr.mxu0 0.0
    %v219 = vand.u32 %v69, 4294901760
    %v220 = vsub.f32 %v69, %v219
    %v221 = vand.u32 %v220, 4294901760
    %v222 = vsub.f32 %v220, %v221
    %v223 = vand.u32 %v222, 4294901760
    %224 = vmatpush1.msra.mxu0 %v223
    %225 = vmatprep.subr.mxu0 0.0
    %v226 = vand.u32 %v70, 4294901760
    %v227 = vsub.f32 %v70, %v226
    %v228 = vand.u32 %v227, 4294901760
    %v229 = vsub.f32 %v227, %v228
    %v230 = vand.u32 %v229, 4294901760
    %231 = vmatpush1.msra.mxu0 %v230
    %232 = vmatprep.subr.mxu0 0.0
    %v233 = vand.u32 %v71, 4294901760
    %v234 = vsub.f32 %v71, %v233
    %v235 = vand.u32 %v234, 4294901760
    %v236 = vsub.f32 %v234, %v235
    %v237 = vand.u32 %v236, 4294901760
    %238 = vmatpush1.msra.mxu0 %v237
    %239 = vmatprep.subr.mxu0 0.0
    %v240 = vand.u32 %v72, 4294901760
    %v241 = vsub.f32 %v72, %v240
    %v242 = vand.u32 %v241, 4294901760
    %v243 = vsub.f32 %v241, %v242
    %v244 = vand.u32 %v243, 4294901760
    %245 = vmatpush1.msra.mxu0 %v244
    %246 = vmatprep.subr.mxu0 0.0
    %v247 = vand.u32 %v73, 4294901760
    %v248 = vsub.f32 %v73, %v247
    %v249 = vand.u32 %v248, 4294901760
    %v250 = vsub.f32 %v248, %v249
    %v251 = vand.u32 %v250, 4294901760
    %252 = vmatpush1.msra.mxu0 %v251
    %253 = vmatprep.subr.mxu0 0.0
    %v254 = vand.u32 %v74, 4294901760
    %v255 = vsub.f32 %v74, %v254
    %v256 = vand.u32 %v255, 4294901760
    %v257 = vsub.f32 %v255, %v256
    %v258 = vand.u32 %v257, 4294901760
    %259 = vmatpush1.msra.mxu0 %v258
    %260 = vmatprep.subr.mxu0 0.0
    %v261 = vand.u32 %v75, 4294901760
    %v262 = vsub.f32 %v75, %v261
    %v263 = vand.u32 %v262, 4294901760
    %v264 = vsub.f32 %v262, %v263
    %v265 = vand.u32 %v264, 4294901760
    %266 = vmatpush1.msra.mxu0 %v265
    %267 = vmatprep.subr.mxu0 0.0
    %v268 = vand.u32 %v76, 4294901760
    %v269 = vsub.f32 %v76, %v268
    %v270 = vand.u32 %v269, 4294901760
    %v271 = vsub.f32 %v269, %v270
    %v272 = vand.u32 %v271, 4294901760
    %273 = vmatpush1.msra.mxu0 %v272
    %274 = vmatprep.subr.mxu0 0.0
    %v275 = vand.u32 %v77, 4294901760
    %v276 = vsub.f32 %v77, %v275
    %v277 = vand.u32 %v276, 4294901760
    %v278 = vsub.f32 %v276, %v277
    %v279 = vand.u32 %v278, 4294901760
    %280 = vmatpush1.msra.mxu0 %v279
    %281 = vmatprep.subr.mxu0 0.0
    %v282 = vand.u32 %v78, 4294901760
    %v283 = vsub.f32 %v78, %v282
    %v284 = vand.u32 %v283, 4294901760
    %v285 = vsub.f32 %v283, %v284
    %v286 = vand.u32 %v285, 4294901760
    %287 = vmatpush1.msra.mxu0 %v286
    %288 = vmatprep.subr.mxu0 0.0
    %v289 = vand.u32 %v79, 4294901760
    %v290 = vsub.f32 %v79, %v289
    %v291 = vand.u32 %v290, 4294901760
    %v292 = vsub.f32 %v290, %v291
    %v293 = vand.u32 %v292, 4294901760
    %294 = vmatpush1.msra.mxu0 %v293
    %295 = vmatprep.subr.mxu0 0.0
    %v296 = vand.u32 %v80, 4294901760
    %v297 = vsub.f32 %v80, %v296
    %v298 = vand.u32 %v297, 4294901760
    %v299 = vsub.f32 %v297, %v298
    %v300 = vand.u32 %v299, 4294901760
    %301 = vmatpush1.msra.mxu0 %v300
    %302 = vmatprep.subr.mxu0 0.0
    %v303 = vand.u32 %v81, 4294901760
    %v304 = vsub.f32 %v81, %v303
    %v305 = vand.u32 %v304, 4294901760
    %v306 = vsub.f32 %v304, %v305
    %v307 = vand.u32 %v306, 4294901760
    %308 = vmatpush1.msra.mxu0 %v307
    %309 = vmatprep.subr.mxu0 0.0
    %v310 = vand.u32 %v82, 4294901760
    %v311 = vsub.f32 %v82, %v310
    %v312 = vand.u32 %v311, 4294901760
    %v313 = vsub.f32 %v311, %v312
    %v314 = vand.u32 %v313, 4294901760
    %315 = vmatpush1.msra.mxu0 %v314
    %316 = vmatprep.subr.mxu0 0.0
    %317 = vmatpush1.msra.mxu0 0.0
    %318 = vmatprep.subr.mxu0 0.0
    %319 = vmatpush1.msra.mxu0 0.0
    %320 = vmatprep.subr.mxu0 0.0
    %321 = vmatpush1.msra.mxu0 0.0
    %322 = vmatprep.subr.mxu0 0.0
    %323 = vmatpush1.msra.mxu0 0.0
    %324 = vmatprep.subr.mxu0 0.0
    %325 = vmatpush1.msra.mxu0 0.0
    %326 = vmatprep.subr.mxu0 0.0
    %327 = vmatpush1.msra.mxu0 0.0
    %328 = vmatprep.subr.mxu0 0.0
    %329 = vmatpush1.msra.mxu0 0.0
    %330 = vmatprep.subr.mxu0 0.0
    %331 = vmatpush1.msra.mxu0 0.0
    %332 = vmatprep.subr.mxu0 0.0
    %333 = vmatpush1.msra.mxu0 0.0
    %334 = vmatprep.subr.mxu0 0.0
    %335 = vmatpush1.msra.mxu0 0.0
    %336 = vmatprep.subr.mxu0 0.0
    %337 = vmatpush1.msra.mxu0 0.0
    %338 = vmatprep.subr.mxu0 0.0
    %339 = vmatpush1.msra.mxu0 0.0
    %340 = vmatprep.subr.mxu0 0.0
    %341 = vmatpush1.msra.mxu0 0.0
    %342 = vmatprep.subr.mxu0 0.0
    %343 = vmatpush1.msra.mxu0 0.0
    %344 = vmatprep.subr.mxu0 0.0
    %345 = vmatpush1.msra.mxu0 0.0
    %346 = vmatprep.subr.mxu0 0.0
    %347 = vmatpush1.msra.mxu0 0.0
    %348 = vmatprep.mubr.f32.mxu0 0.0
    %v349 = vand.u32 %v63, 4294901760
    %350 = vmatmul.mubr.f32.gmra.mrb[0].mxu0 %v349
    %v351 = vpop.f32.mrb[0].mxu0
    %v352 = vadd.f32 %v171, %v351
    %v353 = vpop.f32.mrb[0].mxu0
    %354 = vmatprep.mubr.f32.mxu0 0.0
    %v355 = vand.u32 %v64, 4294901760
    %356 = vmatmul.mubr.f32.gmra.mrb[0].mxu0 %v355
    %v357 = vpop.f32.mrb[0].mxu0
    %v358 = vadd.f32 %v181, %v357
    %v359 = vpop.f32.mrb[0].mxu0
    %360 = vmatprep.mubr.f32.mxu0 0.0
    %v361 = vand.u32 %v65, 4294901760
    %362 = vmatmul.mubr.f32.gmra.mrb[0].mxu0 %v361
    %v363 = vpop.f32.mrb[0].mxu0
    %v364 = vadd.f32 %v191, %v363
    %v365 = vpop.f32.mrb[0].mxu0
    %366 = vmatprep.mubr.f32.mxu0 0.0
    %v367 = vand.u32 %v66, 4294901760
    %368 = vmatmul.mubr.f32.gmra.mrb[0].mxu0 %v367
    %v369 = vpop.f32.mrb[0].mxu0
    %v370 = vadd.f32 %v201, %v369
    %v371 = vpop.f32.mrb[0].mxu0
    %372 = vdwg.mxu0
    %373 = vmatprep.subr.mxu0 0.0
    %v374 = vand.u32 %v67, 4294901760
    %v375 = vsub.f32 %v67, %v374
    %376 = vmatpush1.msra.mxu0 %v375
    %377 = vmatprep.subr.mxu0 0.0
    %v378 = vand.u32 %v68, 4294901760
    %v379 = vsub.f32 %v68, %v378
    %380 = vmatpush1.msra.mxu0 %v379
    %381 = vmatprep.subr.mxu0 0.0
    %v382 = vand.u32 %v69, 4294901760
    %v383 = vsub.f32 %v69, %v382
    %384 = vmatpush1.msra.mxu0 %v383
    %385 = vmatprep.subr.mxu0 0.0
    %v386 = vand.u32 %v70, 4294901760
    %v387 = vsub.f32 %v70, %v386
    %388 = vmatpush1.msra.mxu0 %v387
    %389 = vmatprep.subr.mxu0 0.0
    %v390 = vand.u32 %v71, 4294901760
    %v391 = vsub.f32 %v71, %v390
    %392 = vmatpush1.msra.mxu0 %v391
    %393 = vmatprep.subr.mxu0 0.0
    %v394 = vand.u32 %v72, 4294901760
    %v395 = vsub.f32 %v72, %v394
    %396 = vmatpush1.msra.mxu0 %v395
    %397 = vmatprep.subr.mxu0 0.0
    %v398 = vand.u32 %v73, 4294901760
    %v399 = vsub.f32 %v73, %v398
    %400 = vmatpush1.msra.mxu0 %v399
    %401 = vmatprep.subr.mxu0 0.0
    %v402 = vand.u32 %v74, 4294901760
    %v403 = vsub.f32 %v74, %v402
    %404 = vmatpush1.msra.mxu0 %v403
    %405 = vmatprep.subr.mxu0 0.0
    %v406 = vand.u32 %v75, 4294901760
    %v407 = vsub.f32 %v75, %v406
    %408 = vmatpush1.msra.mxu0 %v407
    %409 = vmatprep.subr.mxu0 0.0
    %v410 = vand.u32 %v76, 4294901760
    %v411 = vsub.f32 %v76, %v410
    %412 = vmatpush1.msra.mxu0 %v411
    %413 = vmatprep.subr.mxu0 0.0
    %v414 = vand.u32 %v77, 4294901760
    %v415 = vsub.f32 %v77, %v414
    %416 = vmatpush1.msra.mxu0 %v415
    %417 = vmatprep.subr.mxu0 0.0
    %v418 = vand.u32 %v78, 4294901760
    %v419 = vsub.f32 %v78, %v418
    %420 = vmatpush1.msra.mxu0 %v419
    %421 = vmatprep.subr.mxu0 0.0
    %v422 = vand.u32 %v79, 4294901760
    %v423 = vsub.f32 %v79, %v422
    %424 = vmatpush1.msra.mxu0 %v423
    %425 = vmatprep.subr.mxu0 0.0
    %v426 = vand.u32 %v80, 4294901760
    %v427 = vsub.f32 %v80, %v426
    %428 = vmatpush1.msra.mxu0 %v427
    %429 = vmatprep.subr.mxu0 0.0
    %v430 = vand.u32 %v81, 4294901760
    %v431 = vsub.f32 %v81, %v430
    %432 = vmatpush1.msra.mxu0 %v431
    %433 = vmatprep.subr.mxu0 0.0
    %v434 = vand.u32 %v82, 4294901760
    %v435 = vsub.f32 %v82, %v434
    %436 = vmatpush1.msra.mxu0 %v435
    %437 = vmatprep.subr.mxu0 0.0
    %438 = vmatpush1.msra.mxu0 0.0
    %439 = vmatprep.subr.mxu0 0.0
    %440 = vmatpush1.msra.mxu0 0.0
    %441 = vmatprep.subr.mxu0 0.0
    %442 = vmatpush1.msra.mxu0 0.0
    %443 = vmatprep.subr.mxu0 0.0
    %444 = vmatpush1.msra.mxu0 0.0
    %445 = vmatprep.subr.mxu0 0.0
    %446 = vmatpush1.msra.mxu0 0.0
    %447 = vmatprep.subr.mxu0 0.0
    %448 = vmatpush1.msra.mxu0 0.0
    %449 = vmatprep.subr.mxu0 0.0
    %450 = vmatpush1.msra.mxu0 0.0
    %451 = vmatprep.subr.mxu0 0.0
    %452 = vmatpush1.msra.mxu0 0.0
    %453 = vmatprep.subr.mxu0 0.0
    %454 = vmatpush1.msra.mxu0 0.0
    %455 = vmatprep.subr.mxu0 0.0
    %456 = vmatpush1.msra.mxu0 0.0
    %457 = vmatprep.subr.mxu0 0.0
    %458 = vmatpush1.msra.mxu0 0.0
    %459 = vmatprep.subr.mxu0 0.0
    %460 = vmatpush1.msra.mxu0 0.0
    %461 = vmatprep.subr.mxu0 0.0
    %462 = vmatpush1.msra.mxu0 0.0
    %463 = vmatprep.subr.mxu0 0.0
    %464 = vmatpush1.msra.mxu0 0.0
    %465 = vmatprep.subr.mxu0 0.0
    %466 = vmatpush1.msra.mxu0 0.0
    %467 = vmatprep.subr.mxu0 0.0
    %468 = vmatpush1.msra.mxu0 0.0
    %469 = vmatprep.mubr.f32.mxu0 0.0
    %v470 = vand.u32 %v63, 4294901760
    %v471 = vsub.f32 %v63, %v470
    %472 = vmatmul.mubr.f32.gmra.mrb[0].mxu0 %v471
    %v473 = vpop.f32.mrb[0].mxu0
    %v474 = vadd.f32 %v352, %v473
    %v475 = vpop.f32.mrb[0].mxu0
    %476 = vmatprep.mubr.f32.mxu0 0.0
    %v477 = vand.u32 %v64, 4294901760
    %v478 = vsub.f32 %v64, %v477
    %479 = vmatmul.mubr.f32.gmra.mrb[0].mxu0 %v478
    %v480 = vpop.f32.mrb[0].mxu0
    %v481 = vadd.f32 %v358, %v480
    %v482 = vpop.f32.mrb[0].mxu0
    %483 = vmatprep.mubr.f32.mxu0 0.0
    %v484 = vand.u32 %v65, 4294901760
    %v485 = vsub.f32 %v65, %v484
    %486 = vmatmul.mubr.f32.gmra.mrb[0].mxu0 %v485
    %v487 = vpop.f32.mrb[0].mxu0
    %v488 = vadd.f32 %v364, %v487
    %v489 = vpop.f32.mrb[0].mxu0
    %490 = vmatprep.mubr.f32.mxu0 0.0
    %v491 = vand.u32 %v66, 4294901760
    %v492 = vsub.f32 %v66, %v491
    %493 = vmatmul.mubr.f32.gmra.mrb[0].mxu0 %v492
    %v494 = vpop.f32.mrb[0].mxu0
    %v495 = vadd.f32 %v370, %v494
    %v496 = vpop.f32.mrb[0].mxu0
    %497 = vdwg.mxu0
    %498 = vmatprep.subr.mxu0 0.0
    %v499 = vand.u32 %v67, 4294901760
    %500 = vmatpush1.msra.mxu0 %v499
    %501 = vmatprep.subr.mxu0 0.0
    %v502 = vand.u32 %v68, 4294901760
    %503 = vmatpush1.msra.mxu0 %v502
    %504 = vmatprep.subr.mxu0 0.0
    %v505 = vand.u32 %v69, 4294901760
    %506 = vmatpush1.msra.mxu0 %v505
    %507 = vmatprep.subr.mxu0 0.0
    %v508 = vand.u32 %v70, 4294901760
    %509 = vmatpush1.msra.mxu0 %v508
    %510 = vmatprep.subr.mxu0 0.0
    %v511 = vand.u32 %v71, 4294901760
    %512 = vmatpush1.msra.mxu0 %v511
    %513 = vmatprep.subr.mxu0 0.0
    %v514 = vand.u32 %v72, 4294901760
    %515 = vmatpush1.msra.mxu0 %v514
    %516 = vmatprep.subr.mxu0 0.0
    %v517 = vand.u32 %v73, 4294901760
    %518 = vmatpush1.msra.mxu0 %v517
    %519 = vmatprep.subr.mxu0 0.0
    %v520 = vand.u32 %v74, 4294901760
    %521 = vmatpush1.msra.mxu0 %v520
    %522 = vmatprep.subr.mxu0 0.0
    %v523 = vand.u32 %v75, 4294901760
    %524 = vmatpush1.msra.mxu0 %v523
    %525 = vmatprep.subr.mxu0 0.0
    %v526 = vand.u32 %v76, 4294901760
    %527 = vmatpush1.msra.mxu0 %v526
    %528 = vmatprep.subr.mxu0 0.0
    %v529 = vand.u32 %v77, 4294901760
    %530 = vmatpush1.msra.mxu0 %v529
    %531 = vmatprep.subr.mxu0 0.0
    %v532 = vand.u32 %v78, 4294901760
    %533 = vmatpush1.msra.mxu0 %v532
    %534 = vmatprep.subr.mxu0 0.0
    %v535 = vand.u32 %v79, 4294901760
    %536 = vmatpush1.msra.mxu0 %v535
    %537 = vmatprep.subr.mxu0 0.0
    %v538 = vand.u32 %v80, 4294901760
    %539 = vmatpush1.msra.mxu0 %v538
    %540 = vmatprep.subr.mxu0 0.0
    %v541 = vand.u32 %v81, 4294901760
    %542 = vmatpush1.msra.mxu0 %v541
    %543 = vmatprep.subr.mxu0 0.0
    %v544 = vand.u32 %v82, 4294901760
    %545 = vmatpush1.msra.mxu0 %v544
    %546 = vmatprep.subr.mxu0 0.0
    %547 = vmatpush1.msra.mxu0 0.0
    %548 = vmatprep.subr.mxu0 0.0
    %549 = vmatpush1.msra.mxu0 0.0
    %550 = vmatprep.subr.mxu0 0.0
    %551 = vmatpush1.msra.mxu0 0.0
    %552 = vmatprep.subr.mxu0 0.0
    %553 = vmatpush1.msra.mxu0 0.0
    %554 = vmatprep.subr.mxu0 0.0
    %555 = vmatpush1.msra.mxu0 0.0
    %556 = vmatprep.subr.mxu0 0.0
    %557 = vmatpush1.msra.mxu0 0.0
    %558 = vmatprep.subr.mxu0 0.0
    %559 = vmatpush1.msra.mxu0 0.0
    %560 = vmatprep.subr.mxu0 0.0
    %561 = vmatpush1.msra.mxu0 0.0
    %562 = vmatprep.subr.mxu0 0.0
    %563 = vmatpush1.msra.mxu0 0.0
    %564 = vmatprep.subr.mxu0 0.0
    %565 = vmatpush1.msra.mxu0 0.0
    %566 = vmatprep.subr.mxu0 0.0
    %567 = vmatpush1.msra.mxu0 0.0
    %568 = vmatprep.subr.mxu0 0.0
    %569 = vmatpush1.msra.mxu0 0.0
    %570 = vmatprep.subr.mxu0 0.0
    %571 = vmatpush1.msra.mxu0 0.0
    %572 = vmatprep.subr.mxu0 0.0
    %573 = vmatpush1.msra.mxu0 0.0
    %574 = vmatprep.subr.mxu0 0.0
    %575 = vmatpush1.msra.mxu0 0.0
    %576 = vmatprep.subr.mxu0 0.0
    %577 = vmatpush1.msra.mxu0 0.0
    %578 = vmatprep.mubr.f32.mxu0 0.0
    %v579 = vand.u32 %v63, 4294901760
    %v580 = vsub.f32 %v63, %v579
    %v581 = vand.u32 %v580, 4294901760
    %582 = vmatmul.mubr.f32.gmra.mrb[0].mxu0 %v581
    %v583 = vpop.f32.mrb[0].mxu0
    %v584 = vadd.f32 %v474, %v583
    %v585 = vpop.f32.mrb[0].mxu0
    %586 = vmatprep.mubr.f32.mxu0 0.0
    %v587 = vand.u32 %v64, 4294901760
    %v588 = vsub.f32 %v64, %v587
    %v589 = vand.u32 %v588, 4294901760
    %590 = vmatmul.mubr.f32.gmra.mrb[0].mxu0 %v589
    %v591 = vpop.f32.mrb[0].mxu0
    %v592 = vadd.f32 %v481, %v591
    %v593 = vpop.f32.mrb[0].mxu0
    %594 = vmatprep.mubr.f32.mxu0 0.0
    %v595 = vand.u32 %v65, 4294901760
    %v596 = vsub.f32 %v65, %v595
    %v597 = vand.u32 %v596, 4294901760
    %598 = vmatmul.mubr.f32.gmra.mrb[0].mxu0 %v597
    %v599 = vpop.f32.mrb[0].mxu0
    %v600 = vadd.f32 %v488, %v599
    %v601 = vpop.f32.mrb[0].mxu0
    %602 = vmatprep.mubr.f32.mxu0 0.0
    %v603 = vand.u32 %v66, 4294901760
    %v604 = vsub.f32 %v66, %v603
    %v605 = vand.u32 %v604, 4294901760
    %606 = vmatmul.mubr.f32.gmra.mrb[0].mxu0 %v605
    %v607 = vpop.f32.mrb[0].mxu0
    %v608 = vadd.f32 %v495, %v607
    %v609 = vpop.f32.mrb[0].mxu0
    %610 = vdwg.mxu0
    %611 = vmatprep.subr.mxu0 0.0
    %v612 = vand.u32 %v67, 4294901760
    %v613 = vsub.f32 %v67, %v612
    %v614 = vand.u32 %v613, 4294901760
    %615 = vmatpush1.msra.mxu0 %v614
    %616 = vmatprep.subr.mxu0 0.0
    %v617 = vand.u32 %v68, 4294901760
    %v618 = vsub.f32 %v68, %v617
    %v619 = vand.u32 %v618, 4294901760
    %620 = vmatpush1.msra.mxu0 %v619
    %621 = vmatprep.subr.mxu0 0.0
    %v622 = vand.u32 %v69, 4294901760
    %v623 = vsub.f32 %v69, %v622
    %v624 = vand.u32 %v623, 4294901760
    %625 = vmatpush1.msra.mxu0 %v624
    %626 = vmatprep.subr.mxu0 0.0
    %v627 = vand.u32 %v70, 4294901760
    %v628 = vsub.f32 %v70, %v627
    %v629 = vand.u32 %v628, 4294901760
    %630 = vmatpush1.msra.mxu0 %v629
    %631 = vmatprep.subr.mxu0 0.0
    %v632 = vand.u32 %v71, 4294901760
    %v633 = vsub.f32 %v71, %v632
    %v634 = vand.u32 %v633, 4294901760
    %635 = vmatpush1.msra.mxu0 %v634
    %636 = vmatprep.subr.mxu0 0.0
    %v637 = vand.u32 %v72, 4294901760
    %v638 = vsub.f32 %v72, %v637
    %v639 = vand.u32 %v638, 4294901760
    %640 = vmatpush1.msra.mxu0 %v639
    %641 = vmatprep.subr.mxu0 0.0
    %v642 = vand.u32 %v73, 4294901760
    %v643 = vsub.f32 %v73, %v642
    %v644 = vand.u32 %v643, 4294901760
    %645 = vmatpush1.msra.mxu0 %v644
    %646 = vmatprep.subr.mxu0 0.0
    %v647 = vand.u32 %v74, 4294901760
    %v648 = vsub.f32 %v74, %v647
    %v649 = vand.u32 %v648, 4294901760
    %650 = vmatpush1.msra.mxu0 %v649
    %651 = vmatprep.subr.mxu0 0.0
    %v652 = vand.u32 %v75, 4294901760
    %v653 = vsub.f32 %v75, %v652
    %v654 = vand.u32 %v653, 4294901760
    %655 = vmatpush1.msra.mxu0 %v654
    %656 = vmatprep.subr.mxu0 0.0
    %v657 = vand.u32 %v76, 4294901760
    %v658 = vsub.f32 %v76, %v657
    %v659 = vand.u32 %v658, 4294901760
    %660 = vmatpush1.msra.mxu0 %v659
    %661 = vmatprep.subr.mxu0 0.0
    %v662 = vand.u32 %v77, 4294901760
    %v663 = vsub.f32 %v77, %v662
    %v664 = vand.u32 %v663, 4294901760
    %665 = vmatpush1.msra.mxu0 %v664
    %666 = vmatprep.subr.mxu0 0.0
    %v667 = vand.u32 %v78, 4294901760
    %v668 = vsub.f32 %v78, %v667
    %v669 = vand.u32 %v668, 4294901760
    %670 = vmatpush1.msra.mxu0 %v669
    %671 = vmatprep.subr.mxu0 0.0
    %v672 = vand.u32 %v79, 4294901760
    %v673 = vsub.f32 %v79, %v672
    %v674 = vand.u32 %v673, 4294901760
    %675 = vmatpush1.msra.mxu0 %v674
    %676 = vmatprep.subr.mxu0 0.0
    %v677 = vand.u32 %v80, 4294901760
    %v678 = vsub.f32 %v80, %v677
    %v679 = vand.u32 %v678, 4294901760
    %680 = vmatpush1.msra.mxu0 %v679
    %681 = vmatprep.subr.mxu0 0.0
    %v682 = vand.u32 %v81, 4294901760
    %v683 = vsub.f32 %v81, %v682
    %v684 = vand.u32 %v683, 4294901760
    %685 = vmatpush1.msra.mxu0 %v684
    %686 = vmatprep.subr.mxu0 0.0
    %v687 = vand.u32 %v82, 4294901760
    %v688 = vsub.f32 %v82, %v687
    %v689 = vand.u32 %v688, 4294901760
    %690 = vmatpush1.msra.mxu0 %v689
    %691 = vmatprep.subr.mxu0 0.0
    %692 = vmatpush1.msra.mxu0 0.0
    %693 = vmatprep.subr.mxu0 0.0
    %694 = vmatpush1.msra.mxu0 0.0
    %695 = vmatprep.subr.mxu0 0.0
    %696 = vmatpush1.msra.mxu0 0.0
    %697 = vmatprep.subr.mxu0 0.0
    %698 = vmatpush1.msra.mxu0 0.0
    %699 = vmatprep.subr.mxu0 0.0
    %700 = vmatpush1.msra.mxu0 0.0
    %701 = vmatprep.subr.mxu0 0.0
    %702 = vmatpush1.msra.mxu0 0.0
    %703 = vmatprep.subr.mxu0 0.0
    %704 = vmatpush1.msra.mxu0 0.0
    %705 = vmatprep.subr.mxu0 0.0
    %706 = vmatpush1.msra.mxu0 0.0
    %707 = vmatprep.subr.mxu0 0.0
    %708 = vmatpush1.msra.mxu0 0.0
    %709 = vmatprep.subr.mxu0 0.0
    %710 = vmatpush1.msra.mxu0 0.0
    %711 = vmatprep.subr.mxu0 0.0
    %712 = vmatpush1.msra.mxu0 0.0
    %713 = vmatprep.subr.mxu0 0.0
    %714 = vmatpush1.msra.mxu0 0.0
    %715 = vmatprep.subr.mxu0 0.0
    %716 = vmatpush1.msra.mxu0 0.0
    %717 = vmatprep.subr.mxu0 0.0
    %718 = vmatpush1.msra.mxu0 0.0
    %719 = vmatprep.subr.mxu0 0.0
    %720 = vmatpush1.msra.mxu0 0.0
    %721 = vmatprep.subr.mxu0 0.0
    %722 = vmatpush1.msra.mxu0 0.0
    %723 = vmatprep.mubr.f32.mxu0 0.0
    %v724 = vand.u32 %v63, 4294901760
    %725 = vmatmul.mubr.f32.gmra.mrb[0].mxu0 %v724
    %v726 = vpop.f32.mrb[0].mxu0
    %v727 = vadd.f32 %v584, %v726
    %v728 = vpop.f32.mrb[0].mxu0
    %729 = vmatprep.mubr.f32.mxu0 0.0
    %v730 = vand.u32 %v64, 4294901760
    %731 = vmatmul.mubr.f32.gmra.mrb[0].mxu0 %v730
    %v732 = vpop.f32.mrb[0].mxu0
    %v733 = vadd.f32 %v592, %v732
    %v734 = vpop.f32.mrb[0].mxu0
    %735 = vmatprep.mubr.f32.mxu0 0.0
    %v736 = vand.u32 %v65, 4294901760
    %737 = vmatmul.mubr.f32.gmra.mrb[0].mxu0 %v736
    %v738 = vpop.f32.mrb[0].mxu0
    %v739 = vadd.f32 %v600, %v738
    %v740 = vpop.f32.mrb[0].mxu0
    %741 = vmatprep.mubr.f32.mxu0 0.0
    %v742 = vand.u32 %v66, 4294901760
    %743 = vmatmul.mubr.f32.gmra.mrb[0].mxu0 %v742
    %v744 = vpop.f32.mrb[0].mxu0
    %v745 = vadd.f32 %v608, %v744
    %v746 = vpop.f32.mrb[0].mxu0
    %747 = vdwg.mxu0
    %748 = vmatprep.subr.mxu0 0.0
    %v749 = vand.u32 %v67, 4294901760
    %750 = vmatpush1.msra.mxu0 %v749
    %751 = vmatprep.subr.mxu0 0.0
    %v752 = vand.u32 %v68, 4294901760
    %753 = vmatpush1.msra.mxu0 %v752
    %754 = vmatprep.subr.mxu0 0.0
    %v755 = vand.u32 %v69, 4294901760
    %756 = vmatpush1.msra.mxu0 %v755
    %757 = vmatprep.subr.mxu0 0.0
    %v758 = vand.u32 %v70, 4294901760
    %759 = vmatpush1.msra.mxu0 %v758
    %760 = vmatprep.subr.mxu0 0.0
    %v761 = vand.u32 %v71, 4294901760
    %762 = vmatpush1.msra.mxu0 %v761
    %763 = vmatprep.subr.mxu0 0.0
    %v764 = vand.u32 %v72, 4294901760
    %765 = vmatpush1.msra.mxu0 %v764
    %766 = vmatprep.subr.mxu0 0.0
    %v767 = vand.u32 %v73, 4294901760
    %768 = vmatpush1.msra.mxu0 %v767
    %769 = vmatprep.subr.mxu0 0.0
    %v770 = vand.u32 %v74, 4294901760
    %771 = vmatpush1.msra.mxu0 %v770
    %772 = vmatprep.subr.mxu0 0.0
    %v773 = vand.u32 %v75, 4294901760
    %774 = vmatpush1.msra.mxu0 %v773
    %775 = vmatprep.subr.mxu0 0.0
    %v776 = vand.u32 %v76, 4294901760
    %777 = vmatpush1.msra.mxu0 %v776
    %778 = vmatprep.subr.mxu0 0.0
    %v779 = vand.u32 %v77, 4294901760
    %780 = vmatpush1.msra.mxu0 %v779
    %781 = vmatprep.subr.mxu0 0.0
    %v782 = vand.u32 %v78, 4294901760
    %783 = vmatpush1.msra.mxu0 %v782
    %784 = vmatprep.subr.mxu0 0.0
    %v785 = vand.u32 %v79, 4294901760
    %786 = vmatpush1.msra.mxu0 %v785
    %787 = vmatprep.subr.mxu0 0.0
    %v788 = vand.u32 %v80, 4294901760
    %789 = vmatpush1.msra.mxu0 %v788
    %790 = vmatprep.subr.mxu0 0.0
    %v791 = vand.u32 %v81, 4294901760
    %792 = vmatpush1.msra.mxu0 %v791
    %793 = vmatprep.subr.mxu0 0.0
    %v794 = vand.u32 %v82, 4294901760
    %795 = vmatpush1.msra.mxu0 %v794
    %796 = vmatprep.subr.mxu0 0.0
    %797 = vmatpush1.msra.mxu0 0.0
    %798 = vmatprep.subr.mxu0 0.0
    %799 = vmatpush1.msra.mxu0 0.0
    %800 = vmatprep.subr.mxu0 0.0
    %801 = vmatpush1.msra.mxu0 0.0
    %802 = vmatprep.subr.mxu0 0.0
    %803 = vmatpush1.msra.mxu0 0.0
    %804 = vmatprep.subr.mxu0 0.0
    %805 = vmatpush1.msra.mxu0 0.0
    %806 = vmatprep.subr.mxu0 0.0
    %807 = vmatpush1.msra.mxu0 0.0
    %808 = vmatprep.subr.mxu0 0.0
    %809 = vmatpush1.msra.mxu0 0.0
    %810 = vmatprep.subr.mxu0 0.0
    %811 = vmatpush1.msra.mxu0 0.0
    %812 = vmatprep.subr.mxu0 0.0
    %813 = vmatpush1.msra.mxu0 0.0
    %814 = vmatprep.subr.mxu0 0.0
    %815 = vmatpush1.msra.mxu0 0.0
    %816 = vmatprep.subr.mxu0 0.0
    %817 = vmatpush1.msra.mxu0 0.0
    %818 = vmatprep.subr.mxu0 0.0
    %819 = vmatpush1.msra.mxu0 0.0
    %820 = vmatprep.subr.mxu0 0.0
    %821 = vmatpush1.msra.mxu0 0.0
    %822 = vmatprep.subr.mxu0 0.0
    %823 = vmatpush1.msra.mxu0 0.0
    %824 = vmatprep.subr.mxu0 0.0
    %825 = vmatpush1.msra.mxu0 0.0
    %826 = vmatprep.subr.mxu0 0.0
    %827 = vmatpush1.msra.mxu0 0.0
    %828 = vmatprep.mubr.f32.mxu0 0.0
    %v829 = vand.u32 %v63, 4294901760
    %830 = vmatmul.mubr.f32.gmra.mrb[0].mxu0 %v829
    %v831 = vpop.f32.mrb[0].mxu0
    %v832 = vadd.f32 %v727, %v831
    %v833 = vpop.f32.mrb[0].mxu0
    %834 = vmatprep.mubr.f32.mxu0 0.0
    %v835 = vand.u32 %v64, 4294901760
    %836 = vmatmul.mubr.f32.gmra.mrb[0].mxu0 %v835
    %v837 = vpop.f32.mrb[0].mxu0
    %v838 = vadd.f32 %v733, %v837
    %v839 = vpop.f32.mrb[0].mxu0
    %840 = vmatprep.mubr.f32.mxu0 0.0
    %v841 = vand.u32 %v65, 4294901760
    %842 = vmatmul.mubr.f32.gmra.mrb[0].mxu0 %v841
    %v843 = vpop.f32.mrb[0].mxu0
    %v844 = vadd.f32 %v739, %v843
    %v845 = vpop.f32.mrb[0].mxu0
    %846 = vmatprep.mubr.f32.mxu0 0.0
    %v847 = vand.u32 %v66, 4294901760
    %848 = vmatmul.mubr.f32.gmra.mrb[0].mxu0 %v847
    %v849 = vpop.f32.mrb[0].mxu0
    %v850 = vadd.f32 %v745, %v849
    %v851 = vpop.f32.mrb[0].mxu0
    %852 = vdwg.mxu0
    %v853 = vtanh.pop %v832
    %v854 = vtanh.pop %v838
    %v855 = vtanh.pop %v844
    %v856 = vtanh.pop %v850
    %857 = vst [vmem:[#allocation9] sm:$0xff] %v853
    %858 = vst [vmem:[#allocation9 + $0x8] sm:$0xff] %v854
    %859 = vst [vmem:[#allocation9 + $0x10] sm:$0xff] %v855
    %860 = vst [vmem:[#allocation9 + $0x18] sm:$0xff] %v856
    %v861 = vld [vmem:[#allocation7] sm:$0xff]
    %v862 = vld [vmem:[#allocation7 + $0x8] sm:$0xff]
    %v863 = vld [vmem:[#allocation7 + $0x10] sm:$0xff]
    %v864 = vld [vmem:[#allocation7 + $0x18] sm:$0xff]
    %v865 = vld [vmem:[#allocation7 + $0x20] sm:$0xff]
    %v866 = vld [vmem:[#allocation7 + $0x28] sm:$0xff]
    %v867 = vld [vmem:[#allocation7 + $0x30] sm:$0xff]
    %v868 = vld [vmem:[#allocation7 + $0x38] sm:$0xff]
    %v869 = vld [vmem:[#allocation7 + $0x40] sm:$0xff]
    %v870 = vld [vmem:[#allocation7 + $0x48] sm:$0xff]
    %v871 = vld [vmem:[#allocation7 + $0x50] sm:$0xff]
    %v872 = vld [vmem:[#allocation7 + $0x58] sm:$0xff]
    %v873 = vld [vmem:[#allocation7 + $0x60] sm:$0xff]
    %v874 = vld [vmem:[#allocation7 + $0x68] sm:$0xff]
    %v875 = vld [vmem:[#allocation7 + $0x70] sm:$0xff]
    %v876 = vld [vmem:[#allocation7 + $0x78] sm:$0xff]
    %877 = vmatprep.subr.mxu0 0.0
    %v878 = vand.u32 %v861, 4294901760
    %879 = vmatpush1.msra.mxu0 %v878
    %880 = vmatprep.subr.mxu0 0.0
    %v881 = vand.u32 %v862, 4294901760
    %882 = vmatpush1.msra.mxu0 %v881
    %883 = vmatprep.subr.mxu0 0.0
    %v884 = vand.u32 %v863, 4294901760
    %885 = vmatpush1.msra.mxu0 %v884
    %886 = vmatprep.subr.mxu0 0.0
    %v887 = vand.u32 %v864, 4294901760
    %888 = vmatpush1.msra.mxu0 %v887
    %889 = vmatprep.subr.mxu0 0.0
    %v890 = vand.u32 %v865, 4294901760
    %891 = vmatpush1.msra.mxu0 %v890
    %892 = vmatprep.subr.mxu0 0.0
    %v893 = vand.u32 %v866, 4294901760
    %894 = vmatpush1.msra.mxu0 %v893
    %895 = vmatprep.subr.mxu0 0.0
    %v896 = vand.u32 %v867, 4294901760
    %897 = vmatpush1.msra.mxu0 %v896
    %898 = vmatprep.subr.mxu0 0.0
    %v899 = vand.u32 %v868, 4294901760
    %900 = vmatpush1.msra.mxu0 %v899
    %901 = vmatprep.subr.mxu0 0.0
    %v902 = vand.u32 %v869, 4294901760
    %903 = vmatpush1.msra.mxu0 %v902
    %904 = vmatprep.subr.mxu0 0.0
    %v905 = vand.u32 %v870, 4294901760
    %906 = vmatpush1.msra.mxu0 %v905
    %907 = vmatprep.subr.mxu0 0.0
    %v908 = vand.u32 %v871, 4294901760
    %909 = vmatpush1.msra.mxu0 %v908
    %910 = vmatprep.subr.mxu0 0.0
    %v911 = vand.u32 %v872, 4294901760
    %912 = vmatpush1.msra.mxu0 %v911
    %913 = vmatprep.subr.mxu0 0.0
    %v914 = vand.u32 %v873, 4294901760
    %915 = vmatpush1.msra.mxu0 %v914
    %916 = vmatprep.subr.mxu0 0.0
    %v917 = vand.u32 %v874, 4294901760
    %918 = vmatpush1.msra.mxu0 %v917
    %919 = vmatprep.subr.mxu0 0.0
    %v920 = vand.u32 %v875, 4294901760
    %921 = vmatpush1.msra.mxu0 %v920
    %922 = vmatprep.subr.mxu0 0.0
    %v923 = vand.u32 %v876, 4294901760
    %924 = vmatpush1.msra.mxu0 %v923
    %925 = vmatprep.subr.mxu0 0.0
    %926 = vmatpush1.msra.mxu0 0.0
    %927 = vmatprep.subr.mxu0 0.0
    %928 = vmatpush1.msra.mxu0 0.0
    %929 = vmatprep.subr.mxu0 0.0
    %930 = vmatpush1.msra.mxu0 0.0
    %931 = vmatprep.subr.mxu0 0.0
    %932 = vmatpush1.msra.mxu0 0.0
    %933 = vmatprep.subr.mxu0 0.0
    %934 = vmatpush1.msra.mxu0 0.0
    %935 = vmatprep.subr.mxu0 0.0
    %936 = vmatpush1.msra.mxu0 0.0
    %937 = vmatprep.subr.mxu0 0.0
    %938 = vmatpush1.msra.mxu0 0.0
    %939 = vmatprep.subr.mxu0 0.0
    %940 = vmatpush1.msra.mxu0 0.0
    %941 = vmatprep.subr.mxu0 0.0
    %942 = vmatpush1.msra.mxu0 0.0
    %943 = vmatprep.subr.mxu0 0.0
    %944 = vmatpush1.msra.mxu0 0.0
    %945 = vmatprep.subr.mxu0 0.0
    %946 = vmatpush1.msra.mxu0 0.0
    %947 = vmatprep.subr.mxu0 0.0
    %948 = vmatpush1.msra.mxu0 0.0
    %949 = vmatprep.subr.mxu0 0.0
    %950 = vmatpush1.msra.mxu0 0.0
    %951 = vmatprep.subr.mxu0 0.0
    %952 = vmatpush1.msra.mxu0 0.0
    %953 = vmatprep.subr.mxu0 0.0
    %954 = vmatpush1.msra.mxu0 0.0
    %955 = vmatprep.subr.mxu0 0.0
    %956 = vmatpush1.msra.mxu0 0.0
    %957 = vmatprep.mubr.f32.mxu0 0.0
    %v958 = vand.u32 %v853, 4294901760
    %v959 = vsub.f32 %v853, %v958
    %v960 = vand.u32 %v959, 4294901760
    %v961 = vsub.f32 %v959, %v960
    %v962 = vand.u32 %v961, 4294901760
    %963 = vmatmul.mubr.f32.gmra.mrb[0].mxu0 %v962
    %v964 = vpop.f32.mrb[0].mxu0
    %v965 = vadd.f32 0.0, %v964
    %v966 = vpop.f32.mrb[0].mxu0
    %967 = vmatprep.mubr.f32.mxu0 0.0
    %v968 = vand.u32 %v854, 4294901760
    %v969 = vsub.f32 %v854, %v968
    %v970 = vand.u32 %v969, 4294901760
    %v971 = vsub.f32 %v969, %v970
    %v972 = vand.u32 %v971, 4294901760
    %973 = vmatmul.mubr.f32.gmra.mrb[0].mxu0 %v972
    %v974 = vpop.f32.mrb[0].mxu0
    %v975 = vadd.f32 0.0, %v974
    %v976 = vpop.f32.mrb[0].mxu0
    %977 = vmatprep.mubr.f32.mxu0 0.0
    %v978 = vand.u32 %v855, 4294901760
    %v979 = vsub.f32 %v855, %v978
    %v980 = vand.u32 %v979, 4294901760
    %v981 = vsub.f32 %v979, %v980
    %v982 = vand.u32 %v981, 4294901760
    %983 = vmatmul.mubr.f32.gmra.mrb[0].mxu0 %v982
    %v984 = vpop.f32.mrb[0].mxu0
    %v985 = vadd.f32 0.0, %v984
    %v986 = vpop.f32.mrb[0].mxu0
    %987 = vmatprep.mubr.f32.mxu0 0.0
    %v988 = vand.u32 %v856, 4294901760
    %v989 = vsub.f32 %v856, %v988
    %v990 = vand.u32 %v989, 4294901760
    %v991 = vsub.f32 %v989, %v990
    %v992 = vand.u32 %v991, 4294901760
    %993 = vmatmul.mubr.f32.gmra.mrb[0].mxu0 %v992
    %v994 = vpop.f32.mrb[0].mxu0
    %v995 = vadd.f32 0.0, %v994
    %v996 = vpop.f32.mrb[0].mxu0
    %997 = vdwg.mxu0
    %998 = vmatprep.subr.mxu0 0.0
    %v999 = vand.u32 %v861, 4294901760
    %v1000 = vsub.f32 %v861, %v999
    %v1001 = vand.u32 %v1000, 4294901760
    %v1002 = vsub.f32 %v1000, %v1001
    %v1003 = vand.u32 %v1002, 4294901760
    %1004 = vmatpush1.msra.mxu0 %v1003
    %1005 = vmatprep.subr.mxu0 0.0
    %v1006 = vand.u32 %v862, 4294901760
    %v1007 = vsub.f32 %v862, %v1006
    %v1008 = vand.u32 %v1007, 4294901760
    %v1009 = vsub.f32 %v1007, %v1008
    %v1010 = vand.u32 %v1009, 4294901760
    %1011 = vmatpush1.msra.mxu0 %v1010
    %1012 = vmatprep.subr.mxu0 0.0
    %v1013 = vand.u32 %v863, 4294901760
    %v1014 = vsub.f32 %v863, %v1013
    %v1015 = vand.u32 %v1014, 4294901760
    %v1016 = vsub.f32 %v1014, %v1015
    %v1017 = vand.u32 %v1016, 4294901760
    %1018 = vmatpush1.msra.mxu0 %v1017
    %1019 = vmatprep.subr.mxu0 0.0
    %v1020 = vand.u32 %v864, 4294901760
    %v1021 = vsub.f32 %v864, %v1020
    %v1022 = vand.u32 %v1021, 4294901760
    %v1023 = vsub.f32 %v1021, %v1022
    %v1024 = vand.u32 %v1023, 4294901760
    %1025 = vmatpush1.msra.mxu0 %v1024
    %1026 = vmatprep.subr.mxu0 0.0
    %v1027 = vand.u32 %v865, 4294901760
    %v1028 = vsub.f32 %v865, %v1027
    %v1029 = vand.u32 %v1028, 4294901760
    %v1030 = vsub.f32 %v1028, %v1029
    %v1031 = vand.u32 %v1030, 4294901760
    %1032 = vmatpush1.msra.mxu0 %v1031
    %1033 = vmatprep.subr.mxu0 0.0
    %v1034 = vand.u32 %v866, 4294901760
    %v1035 = vsub.f32 %v866, %v1034
    %v1036 = vand.u32 %v1035, 4294901760
    %v1037 = vsub.f32 %v1035, %v1036
    %v1038 = vand.u32 %v1037, 4294901760
    %1039 = vmatpush1.msra.mxu0 %v1038
    %1040 = vmatprep.subr.mxu0 0.0
    %v1041 = vand.u32 %v867, 4294901760
    %v1042 = vsub.f32 %v867, %v1041
    %v1043 = vand.u32 %v1042, 4294901760
    %v1044 = vsub.f32 %v1042, %v1043
    %v1045 = vand.u32 %v1044, 4294901760
    %1046 = vmatpush1.msra.mxu0 %v1045
    %1047 = vmatprep.subr.mxu0 0.0
    %v1048 = vand.u32 %v868, 4294901760
    %v1049 = vsub.f32 %v868, %v1048
    %v1050 = vand.u32 %v1049, 4294901760
    %v1051 = vsub.f32 %v1049, %v1050
    %v1052 = vand.u32 %v1051, 4294901760
    %1053 = vmatpush1.msra.mxu0 %v1052
    %1054 = vmatprep.subr.mxu0 0.0
    %v1055 = vand.u32 %v869, 4294901760
    %v1056 = vsub.f32 %v869, %v1055
    %v1057 = vand.u32 %v1056, 4294901760
    %v1058 = vsub.f32 %v1056, %v1057
    %v1059 = vand.u32 %v1058, 4294901760
    %1060 = vmatpush1.msra.mxu0 %v1059
    %1061 = vmatprep.subr.mxu0 0.0
    %v1062 = vand.u32 %v870, 4294901760
    %v1063 = vsub.f32 %v870, %v1062
    %v1064 = vand.u32 %v1063, 4294901760
    %v1065 = vsub.f32 %v1063, %v1064
    %v1066 = vand.u32 %v1065, 4294901760
    %1067 = vmatpush1.msra.mxu0 %v1066
    %1068 = vmatprep.subr.mxu0 0.0
    %v1069 = vand.u32 %v871, 4294901760
    %v1070 = vsub.f32 %v871, %v1069
    %v1071 = vand.u32 %v1070, 4294901760
    %v1072 = vsub.f32 %v1070, %v1071
    %v1073 = vand.u32 %v1072, 4294901760
    %1074 = vmatpush1.msra.mxu0 %v1073
    %1075 = vmatprep.subr.mxu0 0.0
    %v1076 = vand.u32 %v872, 4294901760
    %v1077 = vsub.f32 %v872, %v1076
    %v1078 = vand.u32 %v1077, 4294901760
    %v1079 = vsub.f32 %v1077, %v1078
    %v1080 = vand.u32 %v1079, 4294901760
    %1081 = vmatpush1.msra.mxu0 %v1080
    %1082 = vmatprep.subr.mxu0 0.0
    %v1083 = vand.u32 %v873, 4294901760
    %v1084 = vsub.f32 %v873, %v1083
    %v1085 = vand.u32 %v1084, 4294901760
    %v1086 = vsub.f32 %v1084, %v1085
    %v1087 = vand.u32 %v1086, 4294901760
    %1088 = vmatpush1.msra.mxu0 %v1087
    %1089 = vmatprep.subr.mxu0 0.0
    %v1090 = vand.u32 %v874, 4294901760
    %v1091 = vsub.f32 %v874, %v1090
    %v1092 = vand.u32 %v1091, 4294901760
    %v1093 = vsub.f32 %v1091, %v1092
    %v1094 = vand.u32 %v1093, 4294901760
    %1095 = vmatpush1.msra.mxu0 %v1094
    %1096 = vmatprep.subr.mxu0 0.0
    %v1097 = vand.u32 %v875, 4294901760
    %v1098 = vsub.f32 %v875, %v1097
    %v1099 = vand.u32 %v1098, 4294901760
    %v1100 = vsub.f32 %v1098, %v1099
    %v1101 = vand.u32 %v1100, 4294901760
    %1102 = vmatpush1.msra.mxu0 %v1101
    %1103 = vmatprep.subr.mxu0 0.0
    %v1104 = vand.u32 %v876, 4294901760
    %v1105 = vsub.f32 %v876, %v1104
    %v1106 = vand.u32 %v1105, 4294901760
    %v1107 = vsub.f32 %v1105, %v1106
    %v1108 = vand.u32 %v1107, 4294901760
    %1109 = vmatpush1.msra.mxu0 %v1108
    %1110 = vmatprep.subr.mxu0 0.0
    %1111 = vmatpush1.msra.mxu0 0.0
    %1112 = vmatprep.subr.mxu0 0.0
    %1113 = vmatpush1.msra.mxu0 0.0
    %1114 = vmatprep.subr.mxu0 0.0
    %1115 = vmatpush1.msra.mxu0 0.0
    %1116 = vmatprep.subr.mxu0 0.0
    %1117 = vmatpush1.msra.mxu0 0.0
    %1118 = vmatprep.subr.mxu0 0.0
    %1119 = vmatpush1.msra.mxu0 0.0
    %1120 = vmatprep.subr.mxu0 0.0
    %1121 = vmatpush1.msra.mxu0 0.0
    %1122 = vmatprep.subr.mxu0 0.0
    %1123 = vmatpush1.msra.mxu0 0.0
    %1124 = vmatprep.subr.mxu0 0.0
    %1125 = vmatpush1.msra.mxu0 0.0
    %1126 = vmatprep.subr.mxu0 0.0
    %1127 = vmatpush1.msra.mxu0 0.0
    %1128 = vmatprep.subr.mxu0 0.0
    %1129 = vmatpush1.msra.mxu0 0.0
    %1130 = vmatprep.subr.mxu0 0.0
    %1131 = vmatpush1.msra.mxu0 0.0
    %1132 = vmatprep.subr.mxu0 0.0
    %1133 = vmatpush1.msra.mxu0 0.0
    %1134 = vmatprep.subr.mxu0 0.0
    %1135 = vmatpush1.msra.mxu0 0.0
    %1136 = vmatprep.subr.mxu0 0.0
    %1137 = vmatpush1.msra.mxu0 0.0
    %1138 = vmatprep.subr.mxu0 0.0
    %1139 = vmatpush1.msra.mxu0 0.0
    %1140 = vmatprep.subr.mxu0 0.0
    %1141 = vmatpush1.msra.mxu0 0.0
    %1142 = vmatprep.mubr.f32.mxu0 0.0
    %v1143 = vand.u32 %v853, 4294901760
    %1144 = vmatmul.mubr.f32.gmra.mrb[0].mxu0 %v1143
    %v1145 = vpop.f32.mrb[0].mxu0
    %v1146 = vadd.f32 %v965, %v1145
    %v1147 = vpop.f32.mrb[0].mxu0
    %1148 = vmatprep.mubr.f32.mxu0 0.0
    %v1149 = vand.u32 %v854, 4294901760
    %1150 = vmatmul.mubr.f32.gmra.mrb[0].mxu0 %v1149
    %v1151 = vpop.f32.mrb[0].mxu0
    %v1152 = vadd.f32 %v975, %v1151
    %v1153 = vpop.f32.mrb[0].mxu0
    %1154 = vmatprep.mubr.f32.mxu0 0.0
    %v1155 = vand.u32 %v855, 4294901760
    %1156 = vmatmul.mubr.f32.gmra.mrb[0].mxu0 %v1155
    %v1157 = vpop.f32.mrb[0].mxu0
    %v1158 = vadd.f32 %v985, %v1157
    %v1159 = vpop.f32.mrb[0].mxu0
    %1160 = vmatprep.mubr.f32.mxu0 0.0
    %v1161 = vand.u32 %v856, 4294901760
    %1162 = vmatmul.mubr.f32.gmra.mrb[0].mxu0 %v1161
    %v1163 = vpop.f32.mrb[0].mxu0
    %v1164 = vadd.f32 %v995, %v1163
    %v1165 = vpop.f32.mrb[0].mxu0
    %1166 = vdwg.mxu0
    %1167 = vmatprep.subr.mxu0 0.0
    %v1168 = vand.u32 %v861, 4294901760
    %v1169 = vsub.f32 %v861, %v1168
    %1170 = vmatpush1.msra.mxu0 %v1169
    %1171 = vmatprep.subr.mxu0 0.0
    %v1172 = vand.u32 %v862, 4294901760
    %v1173 = vsub.f32 %v862, %v1172
    %1174 = vmatpush1.msra.mxu0 %v1173
    %1175 = vmatprep.subr.mxu0 0.0
    %v1176 = vand.u32 %v863, 4294901760
    %v1177 = vsub.f32 %v863, %v1176
    %1178 = vmatpush1.msra.mxu0 %v1177
    %1179 = vmatprep.subr.mxu0 0.0
    %v1180 = vand.u32 %v864, 4294901760
    %v1181 = vsub.f32 %v864, %v1180
    %1182 = vmatpush1.msra.mxu0 %v1181
    %1183 = vmatprep.subr.mxu0 0.0
    %v1184 = vand.u32 %v865, 4294901760
    %v1185 = vsub.f32 %v865, %v1184
    %1186 = vmatpush1.msra.mxu0 %v1185
    %1187 = vmatprep.subr.mxu0 0.0
    %v1188 = vand.u32 %v866, 4294901760
    %v1189 = vsub.f32 %v866, %v1188
    %1190 = vmatpush1.msra.mxu0 %v1189
    %1191 = vmatprep.subr.mxu0 0.0
    %v1192 = vand.u32 %v867, 4294901760
    %v1193 = vsub.f32 %v867, %v1192
    %1194 = vmatpush1.msra.mxu0 %v1193
    %1195 = vmatprep.subr.mxu0 0.0
    %v1196 = vand.u32 %v868, 4294901760
    %v1197 = vsub.f32 %v868, %v1196
    %1198 = vmatpush1.msra.mxu0 %v1197
    %1199 = vmatprep.subr.mxu0 0.0
    %v1200 = vand.u32 %v869, 4294901760
    %v1201 = vsub.f32 %v869, %v1200
    %1202 = vmatpush1.msra.mxu0 %v1201
    %1203 = vmatprep.subr.mxu0 0.0
    %v1204 = vand.u32 %v870, 4294901760
    %v1205 = vsub.f32 %v870, %v1204
    %1206 = vmatpush1.msra.mxu0 %v1205
    %1207 = vmatprep.subr.mxu0 0.0
    %v1208 = vand.u32 %v871, 4294901760
    %v1209 = vsub.f32 %v871, %v1208
    %1210 = vmatpush1.msra.mxu0 %v1209
    %1211 = vmatprep.subr.mxu0 0.0
    %v1212 = vand.u32 %v872, 4294901760
    %v1213 = vsub.f32 %v872, %v1212
    %1214 = vmatpush1.msra.mxu0 %v1213
    %1215 = vmatprep.subr.mxu0 0.0
    %v1216 = vand.u32 %v873, 4294901760
    %v1217 = vsub.f32 %v873, %v1216
    %1218 = vmatpush1.msra.mxu0 %v1217
    %1219 = vmatprep.subr.mxu0 0.0
    %v1220 = vand.u32 %v874, 4294901760
    %v1221 = vsub.f32 %v874, %v1220
    %1222 = vmatpush1.msra.mxu0 %v1221
    %1223 = vmatprep.subr.mxu0 0.0
    %v1224 = vand.u32 %v875, 4294901760
    %v1225 = vsub.f32 %v875, %v1224
    %1226 = vmatpush1.msra.mxu0 %v1225
    %1227 = vmatprep.subr.mxu0 0.0
    %v1228 = vand.u32 %v876, 4294901760
    %v1229 = vsub.f32 %v876, %v1228
    %1230 = vmatpush1.msra.mxu0 %v1229
    %1231 = vmatprep.subr.mxu0 0.0
    %1232 = vmatpush1.msra.mxu0 0.0
    %1233 = vmatprep.subr.mxu0 0.0
    %1234 = vmatpush1.msra.mxu0 0.0
    %1235 = vmatprep.subr.mxu0 0.0
    %1236 = vmatpush1.msra.mxu0 0.0
    %1237 = vmatprep.subr.mxu0 0.0
    %1238 = vmatpush1.msra.mxu0 0.0
    %1239 = vmatprep.subr.mxu0 0.0
    %1240 = vmatpush1.msra.mxu0 0.0
    %1241 = vmatprep.subr.mxu0 0.0
    %1242 = vmatpush1.msra.mxu0 0.0
    %1243 = vmatprep.subr.mxu0 0.0
    %1244 = vmatpush1.msra.mxu0 0.0
    %1245 = vmatprep.subr.mxu0 0.0
    %1246 = vmatpush1.msra.mxu0 0.0
    %1247 = vmatprep.subr.mxu0 0.0
    %1248 = vmatpush1.msra.mxu0 0.0
    %1249 = vmatprep.subr.mxu0 0.0
    %1250 = vmatpush1.msra.mxu0 0.0
    %1251 = vmatprep.subr.mxu0 0.0
    %1252 = vmatpush1.msra.mxu0 0.0
    %1253 = vmatprep.subr.mxu0 0.0
    %1254 = vmatpush1.msra.mxu0 0.0
    %1255 = vmatprep.subr.mxu0 0.0
    %1256 = vmatpush1.msra.mxu0 0.0
    %1257 = vmatprep.subr.mxu0 0.0
    %1258 = vmatpush1.msra.mxu0 0.0
    %1259 = vmatprep.subr.mxu0 0.0
    %1260 = vmatpush1.msra.mxu0 0.0
    %1261 = vmatprep.subr.mxu0 0.0
    %1262 = vmatpush1.msra.mxu0 0.0
    %1263 = vmatprep.mubr.f32.mxu0 0.0
    %v1264 = vand.u32 %v853, 4294901760
    %v1265 = vsub.f32 %v853, %v1264
    %1266 = vmatmul.mubr.f32.gmra.mrb[0].mxu0 %v1265
    %v1267 = vpop.f32.mrb[0].mxu0
    %v1268 = vadd.f32 %v1146, %v1267
    %v1269 = vpop.f32.mrb[0].mxu0
    %1270 = vmatprep.mubr.f32.mxu0 0.0
    %v1271 = vand.u32 %v854, 4294901760
    %v1272 = vsub.f32 %v854, %v1271
    %1273 = vmatmul.mubr.f32.gmra.mrb[0].mxu0 %v1272
    %v1274 = vpop.f32.mrb[0].mxu0
    %v1275 = vadd.f32 %v1152, %v1274
    %v1276 = vpop.f32.mrb[0].mxu0
    %1277 = vmatprep.mubr.f32.mxu0 0.0
    %v1278 = vand.u32 %v855, 4294901760
    %v1279 = vsub.f32 %v855, %v1278
    %1280 = vmatmul.mubr.f32.gmra.mrb[0].mxu0 %v1279
    %v1281 = vpop.f32.mrb[0].mxu0
    %v1282 = vadd.f32 %v1158, %v1281
    %v1283 = vpop.f32.mrb[0].mxu0
    %1284 = vmatprep.mubr.f32.mxu0 0.0
    %v1285 = vand.u32 %v856, 4294901760
    %v1286 = vsub.f32 %v856, %v1285
    %1287 = vmatmul.mubr.f32.gmra.mrb[0].mxu0 %v1286
    %v1288 = vpop.f32.mrb[0].mxu0
    %v1289 = vadd.f32 %v1164, %v1288
    %v1290 = vpop.f32.mrb[0].mxu0
    %1291 = vdwg.mxu0
    %1292 = vmatprep.subr.mxu0 0.0
    %v1293 = vand.u32 %v861, 4294901760
    %1294 = vmatpush1.msra.mxu0 %v1293
    %1295 = vmatprep.subr.mxu0 0.0
    %v1296 = vand.u32 %v862, 4294901760
    %1297 = vmatpush1.msra.mxu0 %v1296
    %1298 = vmatprep.subr.mxu0 0.0
    %v1299 = vand.u32 %v863, 4294901760
    %1300 = vmatpush1.msra.mxu0 %v1299
    %1301 = vmatprep.subr.mxu0 0.0
    %v1302 = vand.u32 %v864, 4294901760
    %1303 = vmatpush1.msra.mxu0 %v1302
    %1304 = vmatprep.subr.mxu0 0.0
    %v1305 = vand.u32 %v865, 4294901760
    %1306 = vmatpush1.msra.mxu0 %v1305
    %1307 = vmatprep.subr.mxu0 0.0
    %v1308 = vand.u32 %v866, 4294901760
    %1309 = vmatpush1.msra.mxu0 %v1308
    %1310 = vmatprep.subr.mxu0 0.0
    %v1311 = vand.u32 %v867, 4294901760
    %1312 = vmatpush1.msra.mxu0 %v1311
    %1313 = vmatprep.subr.mxu0 0.0
    %v1314 = vand.u32 %v868, 4294901760
    %1315 = vmatpush1.msra.mxu0 %v1314
    %1316 = vmatprep.subr.mxu0 0.0
    %v1317 = vand.u32 %v869, 4294901760
    %1318 = vmatpush1.msra.mxu0 %v1317
    %1319 = vmatprep.subr.mxu0 0.0
    %v1320 = vand.u32 %v870, 4294901760
    %1321 = vmatpush1.msra.mxu0 %v1320
    %1322 = vmatprep.subr.mxu0 0.0
    %v1323 = vand.u32 %v871, 4294901760
    %1324 = vmatpush1.msra.mxu0 %v1323
    %1325 = vmatprep.subr.mxu0 0.0
    %v1326 = vand.u32 %v872, 4294901760
    %1327 = vmatpush1.msra.mxu0 %v1326
    %1328 = vmatprep.subr.mxu0 0.0
    %v1329 = vand.u32 %v873, 4294901760
    %1330 = vmatpush1.msra.mxu0 %v1329
    %1331 = vmatprep.subr.mxu0 0.0
    %v1332 = vand.u32 %v874, 4294901760
    %1333 = vmatpush1.msra.mxu0 %v1332
    %1334 = vmatprep.subr.mxu0 0.0
    %v1335 = vand.u32 %v875, 4294901760
    %1336 = vmatpush1.msra.mxu0 %v1335
    %1337 = vmatprep.subr.mxu0 0.0
    %v1338 = vand.u32 %v876, 4294901760
    %1339 = vmatpush1.msra.mxu0 %v1338
    %1340 = vmatprep.subr.mxu0 0.0
    %1341 = vmatpush1.msra.mxu0 0.0
    %1342 = vmatprep.subr.mxu0 0.0
    %1343 = vmatpush1.msra.mxu0 0.0
    %1344 = vmatprep.subr.mxu0 0.0
    %1345 = vmatpush1.msra.mxu0 0.0
    %1346 = vmatprep.subr.mxu0 0.0
    %1347 = vmatpush1.msra.mxu0 0.0
    %1348 = vmatprep.subr.mxu0 0.0
    %1349 = vmatpush1.msra.mxu0 0.0
    %1350 = vmatprep.subr.mxu0 0.0
    %1351 = vmatpush1.msra.mxu0 0.0
    %1352 = vmatprep.subr.mxu0 0.0
    %1353 = vmatpush1.msra.mxu0 0.0
    %1354 = vmatprep.subr.mxu0 0.0
    %1355 = vmatpush1.msra.mxu0 0.0
    %1356 = vmatprep.subr.mxu0 0.0
    %1357 = vmatpush1.msra.mxu0 0.0
    %1358 = vmatprep.subr.mxu0 0.0
    %1359 = vmatpush1.msra.mxu0 0.0
    %1360 = vmatprep.subr.mxu0 0.0
    %1361 = vmatpush1.msra.mxu0 0.0
    %1362 = vmatprep.subr.mxu0 0.0
    %1363 = vmatpush1.msra.mxu0 0.0
    %1364 = vmatprep.subr.mxu0 0.0
    %1365 = vmatpush1.msra.mxu0 0.0
    %1366 = vmatprep.subr.mxu0 0.0
    %1367 = vmatpush1.msra.mxu0 0.0
    %1368 = vmatprep.subr.mxu0 0.0
    %1369 = vmatpush1.msra.mxu0 0.0
    %1370 = vmatprep.subr.mxu0 0.0
    %1371 = vmatpush1.msra.mxu0 0.0
    %1372 = vmatprep.mubr.f32.mxu0 0.0
    %v1373 = vand.u32 %v853, 4294901760
    %v1374 = vsub.f32 %v853, %v1373
    %v1375 = vand.u32 %v1374, 4294901760
    %1376 = vmatmul.mubr.f32.gmra.mrb[0].mxu0 %v1375
    %v1377 = vpop.f32.mrb[0].mxu0
    %v1378 = vadd.f32 %v1268, %v1377
    %v1379 = vpop.f32.mrb[0].mxu0
    %1380 = vmatprep.mubr.f32.mxu0 0.0
    %v1381 = vand.u32 %v854, 4294901760
    %v1382 = vsub.f32 %v854, %v1381
    %v1383 = vand.u32 %v1382, 4294901760
    %1384 = vmatmul.mubr.f32.gmra.mrb[0].mxu0 %v1383
    %v1385 = vpop.f32.mrb[0].mxu0
    %v1386 = vadd.f32 %v1275, %v1385
    %v1387 = vpop.f32.mrb[0].mxu0
    %1388 = vmatprep.mubr.f32.mxu0 0.0
    %v1389 = vand.u32 %v855, 4294901760
    %v1390 = vsub.f32 %v855, %v1389
    %v1391 = vand.u32 %v1390, 4294901760
    %1392 = vmatmul.mubr.f32.gmra.mrb[0].mxu0 %v1391
    %v1393 = vpop.f32.mrb[0].mxu0
    %v1394 = vadd.f32 %v1282, %v1393
    %v1395 = vpop.f32.mrb[0].mxu0
    %1396 = vmatprep.mubr.f32.mxu0 0.0
    %v1397 = vand.u32 %v856, 4294901760
    %v1398 = vsub.f32 %v856, %v1397
    %v1399 = vand.u32 %v1398, 4294901760
    %1400 = vmatmul.mubr.f32.gmra.mrb[0].mxu0 %v1399
    %v1401 = vpop.f32.mrb[0].mxu0
    %v1402 = vadd.f32 %v1289, %v1401
    %v1403 = vpop.f32.mrb[0].mxu0
    %1404 = vdwg.mxu0
    %1405 = vmatprep.subr.mxu0 0.0
    %v1406 = vand.u32 %v861, 4294901760
    %v1407 = vsub.f32 %v861, %v1406
    %v1408 = vand.u32 %v1407, 4294901760
    %1409 = vmatpush1.msra.mxu0 %v1408
    %1410 = vmatprep.subr.mxu0 0.0
    %v1411 = vand.u32 %v862, 4294901760
    %v1412 = vsub.f32 %v862, %v1411
    %v1413 = vand.u32 %v1412, 4294901760
    %1414 = vmatpush1.msra.mxu0 %v1413
    %1415 = vmatprep.subr.mxu0 0.0
    %v1416 = vand.u32 %v863, 4294901760
    %v1417 = vsub.f32 %v863, %v1416
    %v1418 = vand.u32 %v1417, 4294901760
    %1419 = vmatpush1.msra.mxu0 %v1418
    %1420 = vmatprep.subr.mxu0 0.0
    %v1421 = vand.u32 %v864, 4294901760
    %v1422 = vsub.f32 %v864, %v1421
    %v1423 = vand.u32 %v1422, 4294901760
    %1424 = vmatpush1.msra.mxu0 %v1423
    %1425 = vmatprep.subr.mxu0 0.0
    %v1426 = vand.u32 %v865, 4294901760
    %v1427 = vsub.f32 %v865, %v1426
    %v1428 = vand.u32 %v1427, 4294901760
    %1429 = vmatpush1.msra.mxu0 %v1428
    %1430 = vmatprep.subr.mxu0 0.0
    %v1431 = vand.u32 %v866, 4294901760
    %v1432 = vsub.f32 %v866, %v1431
    %v1433 = vand.u32 %v1432, 4294901760
    %1434 = vmatpush1.msra.mxu0 %v1433
    %1435 = vmatprep.subr.mxu0 0.0
    %v1436 = vand.u32 %v867, 4294901760
    %v1437 = vsub.f32 %v867, %v1436
    %v1438 = vand.u32 %v1437, 4294901760
    %1439 = vmatpush1.msra.mxu0 %v1438
    %1440 = vmatprep.subr.mxu0 0.0
    %v1441 = vand.u32 %v868, 4294901760
    %v1442 = vsub.f32 %v868, %v1441
    %v1443 = vand.u32 %v1442, 4294901760
    %1444 = vmatpush1.msra.mxu0 %v1443
    %1445 = vmatprep.subr.mxu0 0.0
    %v1446 = vand.u32 %v869, 4294901760
    %v1447 = vsub.f32 %v869, %v1446
    %v1448 = vand.u32 %v1447, 4294901760
    %1449 = vmatpush1.msra.mxu0 %v1448
    %1450 = vmatprep.subr.mxu0 0.0
    %v1451 = vand.u32 %v870, 4294901760
    %v1452 = vsub.f32 %v870, %v1451
    %v1453 = vand.u32 %v1452, 4294901760
    %1454 = vmatpush1.msra.mxu0 %v1453
    %1455 = vmatprep.subr.mxu0 0.0
    %v1456 = vand.u32 %v871, 4294901760
    %v1457 = vsub.f32 %v871, %v1456
    %v1458 = vand.u32 %v1457, 4294901760
    %1459 = vmatpush1.msra.mxu0 %v1458
    %1460 = vmatprep.subr.mxu0 0.0
    %v1461 = vand.u32 %v872, 4294901760
    %v1462 = vsub.f32 %v872, %v1461
    %v1463 = vand.u32 %v1462, 4294901760
    %1464 = vmatpush1.msra.mxu0 %v1463
    %1465 = vmatprep.subr.mxu0 0.0
    %v1466 = vand.u32 %v873, 4294901760
    %v1467 = vsub.f32 %v873, %v1466
    %v1468 = vand.u32 %v1467, 4294901760
    %1469 = vmatpush1.msra.mxu0 %v1468
    %1470 = vmatprep.subr.mxu0 0.0
    %v1471 = vand.u32 %v874, 4294901760
    %v1472 = vsub.f32 %v874, %v1471
    %v1473 = vand.u32 %v1472, 4294901760
    %1474 = vmatpush1.msra.mxu0 %v1473
    %1475 = vmatprep.subr.mxu0 0.0
    %v1476 = vand.u32 %v875, 4294901760
    %v1477 = vsub.f32 %v875, %v1476
    %v1478 = vand.u32 %v1477, 4294901760
    %1479 = vmatpush1.msra.mxu0 %v1478
    %1480 = vmatprep.subr.mxu0 0.0
    %v1481 = vand.u32 %v876, 4294901760
    %v1482 = vsub.f32 %v876, %v1481
    %v1483 = vand.u32 %v1482, 4294901760
    %1484 = vmatpush1.msra.mxu0 %v1483
    %1485 = vmatprep.subr.mxu0 0.0
    %1486 = vmatpush1.msra.mxu0 0.0
    %1487 = vmatprep.subr.mxu0 0.0
    %1488 = vmatpush1.msra.mxu0 0.0
    %1489 = vmatprep.subr.mxu0 0.0
    %1490 = vmatpush1.msra.mxu0 0.0
    %1491 = vmatprep.subr.mxu0 0.0
    %1492 = vmatpush1.msra.mxu0 0.0
    %1493 = vmatprep.subr.mxu0 0.0
    %1494 = vmatpush1.msra.mxu0 0.0
    %1495 = vmatprep.subr.mxu0 0.0
    %1496 = vmatpush1.msra.mxu0 0.0
    %1497 = vmatprep.subr.mxu0 0.0
    %1498 = vmatpush1.msra.mxu0 0.0
    %1499 = vmatprep.subr.mxu0 0.0
    %1500 = vmatpush1.msra.mxu0 0.0
    %1501 = vmatprep.subr.mxu0 0.0
    %1502 = vmatpush1.msra.mxu0 0.0
    %1503 = vmatprep.subr.mxu0 0.0
    %1504 = vmatpush1.msra.mxu0 0.0
    %1505 = vmatprep.subr.mxu0 0.0
    %1506 = vmatpush1.msra.mxu0 0.0
    %1507 = vmatprep.subr.mxu0 0.0
    %1508 = vmatpush1.msra.mxu0 0.0
    %1509 = vmatprep.subr.mxu0 0.0
    %1510 = vmatpush1.msra.mxu0 0.0
    %1511 = vmatprep.subr.mxu0 0.0
    %1512 = vmatpush1.msra.mxu0 0.0
    %1513 = vmatprep.subr.mxu0 0.0
    %1514 = vmatpush1.msra.mxu0 0.0
    %1515 = vmatprep.subr.mxu0 0.0
    %1516 = vmatpush1.msra.mxu0 0.0
    %1517 = vmatprep.mubr.f32.mxu0 0.0
    %v1518 = vand.u32 %v853, 4294901760
    %1519 = vmatmul.mubr.f32.gmra.mrb[0].mxu0 %v1518
    %v1520 = vpop.f32.mrb[0].mxu0
    %v1521 = vadd.f32 %v1378, %v1520
    %v1522 = vpop.f32.mrb[0].mxu0
    %1523 = vmatprep.mubr.f32.mxu0 0.0
    %v1524 = vand.u32 %v854, 4294901760
    %1525 = vmatmul.mubr.f32.gmra.mrb[0].mxu0 %v1524
    %v1526 = vpop.f32.mrb[0].mxu0
    %v1527 = vadd.f32 %v1386, %v1526
    %v1528 = vpop.f32.mrb[0].mxu0
    %1529 = vmatprep.mubr.f32.mxu0 0.0
    %v1530 = vand.u32 %v855, 4294901760
    %1531 = vmatmul.mubr.f32.gmra.mrb[0].mxu0 %v1530
    %v1532 = vpop.f32.mrb[0].mxu0
    %v1533 = vadd.f32 %v1394, %v1532
    %v1534 = vpop.f32.mrb[0].mxu0
    %1535 = vmatprep.mubr.f32.mxu0 0.0
    %v1536 = vand.u32 %v856, 4294901760
    %1537 = vmatmul.mubr.f32.gmra.mrb[0].mxu0 %v1536
    %v1538 = vpop.f32.mrb[0].mxu0
    %v1539 = vadd.f32 %v1402, %v1538
    %v1540 = vpop.f32.mrb[0].mxu0
    %1541 = vdwg.mxu0
    %1542 = vmatprep.subr.mxu0 0.0
    %v1543 = vand.u32 %v861, 4294901760
    %1544 = vmatpush1.msra.mxu0 %v1543
    %1545 = vmatprep.subr.mxu0 0.0
    %v1546 = vand.u32 %v862, 4294901760
    %1547 = vmatpush1.msra.mxu0 %v1546
    %1548 = vmatprep.subr.mxu0 0.0
    %v1549 = vand.u32 %v863, 4294901760
    %1550 = vmatpush1.msra.mxu0 %v1549
    %1551 = vmatprep.subr.mxu0 0.0
    %v1552 = vand.u32 %v864, 4294901760
    %1553 = vmatpush1.msra.mxu0 %v1552
    %1554 = vmatprep.subr.mxu0 0.0
    %v1555 = vand.u32 %v865, 4294901760
    %1556 = vmatpush1.msra.mxu0 %v1555
    %1557 = vmatprep.subr.mxu0 0.0
    %v1558 = vand.u32 %v866, 4294901760
    %1559 = vmatpush1.msra.mxu0 %v1558
    %1560 = vmatprep.subr.mxu0 0.0
    %v1561 = vand.u32 %v867, 4294901760
    %1562 = vmatpush1.msra.mxu0 %v1561
    %1563 = vmatprep.subr.mxu0 0.0
    %v1564 = vand.u32 %v868, 4294901760
    %1565 = vmatpush1.msra.mxu0 %v1564
    %1566 = vmatprep.subr.mxu0 0.0
    %v1567 = vand.u32 %v869, 4294901760
    %1568 = vmatpush1.msra.mxu0 %v1567
    %1569 = vmatprep.subr.mxu0 0.0
    %v1570 = vand.u32 %v870, 4294901760
    %1571 = vmatpush1.msra.mxu0 %v1570
    %1572 = vmatprep.subr.mxu0 0.0
    %v1573 = vand.u32 %v871, 4294901760
    %1574 = vmatpush1.msra.mxu0 %v1573
    %1575 = vmatprep.subr.mxu0 0.0
    %v1576 = vand.u32 %v872, 4294901760
    %1577 = vmatpush1.msra.mxu0 %v1576
    %1578 = vmatprep.subr.mxu0 0.0
    %v1579 = vand.u32 %v873, 4294901760
    %1580 = vmatpush1.msra.mxu0 %v1579
    %1581 = vmatprep.subr.mxu0 0.0
    %v1582 = vand.u32 %v874, 4294901760
    %1583 = vmatpush1.msra.mxu0 %v1582
    %1584 = vmatprep.subr.mxu0 0.0
    %v1585 = vand.u32 %v875, 4294901760
    %1586 = vmatpush1.msra.mxu0 %v1585
    %1587 = vmatprep.subr.mxu0 0.0
    %v1588 = vand.u32 %v876, 4294901760
    %1589 = vmatpush1.msra.mxu0 %v1588
    %1590 = vmatprep.subr.mxu0 0.0
    %1591 = vmatpush1.msra.mxu0 0.0
    %1592 = vmatprep.subr.mxu0 0.0
    %1593 = vmatpush1.msra.mxu0 0.0
    %1594 = vmatprep.subr.mxu0 0.0
    %1595 = vmatpush1.msra.mxu0 0.0
    %1596 = vmatprep.subr.mxu0 0.0
    %1597 = vmatpush1.msra.mxu0 0.0
    %1598 = vmatprep.subr.mxu0 0.0
    %1599 = vmatpush1.msra.mxu0 0.0
    %1600 = vmatprep.subr.mxu0 0.0
    %1601 = vmatpush1.msra.mxu0 0.0
    %1602 = vmatprep.subr.mxu0 0.0
    %1603 = vmatpush1.msra.mxu0 0.0
    %1604 = vmatprep.subr.mxu0 0.0
    %1605 = vmatpush1.msra.mxu0 0.0
    %1606 = vmatprep.subr.mxu0 0.0
    %1607 = vmatpush1.msra.mxu0 0.0
    %1608 = vmatprep.subr.mxu0 0.0
    %1609 = vmatpush1.msra.mxu0 0.0
    %1610 = vmatprep.subr.mxu0 0.0
    %1611 = vmatpush1.msra.mxu0 0.0
    %1612 = vmatprep.subr.mxu0 0.0
    %1613 = vmatpush1.msra.mxu0 0.0
    %1614 = vmatprep.subr.mxu0 0.0
    %1615 = vmatpush1.msra.mxu0 0.0
    %1616 = vmatprep.subr.mxu0 0.0
    %1617 = vmatpush1.msra.mxu0 0.0
    %1618 = vmatprep.subr.mxu0 0.0
    %1619 = vmatpush1.msra.mxu0 0.0
    %1620 = vmatprep.subr.mxu0 0.0
    %1621 = vmatpush1.msra.mxu0 0.0
    %1622 = vmatprep.mubr.f32.mxu0 0.0
    %v1623 = vand.u32 %v853, 4294901760
    %1624 = vmatmul.mubr.f32.gmra.mrb[0].mxu0 %v1623
    %v1625 = vpop.f32.mrb[0].mxu0
    %v1626 = vadd.f32 %v1521, %v1625
    %v1627 = vpop.f32.mrb[0].mxu0
    %1628 = vmatprep.mubr.f32.mxu0 0.0
    %v1629 = vand.u32 %v854, 4294901760
    %1630 = vmatmul.mubr.f32.gmra.mrb[0].mxu0 %v1629
    %v1631 = vpop.f32.mrb[0].mxu0
    %v1632 = vadd.f32 %v1527, %v1631
    %v1633 = vpop.f32.mrb[0].mxu0
    %1634 = vmatprep.mubr.f32.mxu0 0.0
    %v1635 = vand.u32 %v855, 4294901760
    %1636 = vmatmul.mubr.f32.gmra.mrb[0].mxu0 %v1635
    %v1637 = vpop.f32.mrb[0].mxu0
    %v1638 = vadd.f32 %v1533, %v1637
    %v1639 = vpop.f32.mrb[0].mxu0
    %1640 = vmatprep.mubr.f32.mxu0 0.0
    %v1641 = vand.u32 %v856, 4294901760
    %1642 = vmatmul.mubr.f32.gmra.mrb[0].mxu0 %v1641
    %v1643 = vpop.f32.mrb[0].mxu0
    %v1644 = vadd.f32 %v1539, %v1643
    %v1645 = vpop.f32.mrb[0].mxu0
    %1646 = vdwg.mxu0
    %1647 = vst [vmem:[#allocation8] sm:$0xff] %v1626
    %1648 = vst [vmem:[#allocation8 + $0x8] sm:$0xff] %v1632
    %1649 = vst [vmem:[#allocation8 + $0x10] sm:$0xff] %v1638
    %1650 = vst [vmem:[#allocation8 + $0x18] sm:$0xff] %v1644
    // Predicated region
    $region26: #{tpu_custom_call.1} parent=1 // pred_check
      _
    $region27: #{tpu_custom_call.1} parent=1 // pred_check_branch
      %1652 = sbr.rel (0) target = $region29
    $region28: #{tpu_custom_call.1} parent=1 // pred_region
      %s1654 = ssub.s32 512, 512
      %1655 = vsyncadd [#allocation4], %s1654
      %s1656 = sshll.u32 [#allocation8], 4
      %s1657 = int_to_ptr.vmem [resolvable:$true] %s1656
      %1662 = dma.vmem_to_hbm [thread:$0]  %s1657, 512, %s3, [#allocation4], 128, 128, 8
    $region29: #{tpu_custom_call.1} parent=1 // pred_fallthru
      _
    // Predicated region
    $region30: #{tpu_custom_call.1} parent=1 // pred_check
      _
    $region31: #{tpu_custom_call.1} parent=1 // pred_check_branch
      %1664 = sbr.rel (0) target = $region33
    $region32: #{tpu_custom_call.1} parent=1 // pred_region
      %s1666 = ssub.s32 512, 512
      %1667 = vsyncadd [#allocation10], %s1666
      %s1668 = sshll.u32 [#allocation9], 4
      %s1669 = int_to_ptr.vmem [resolvable:$true] %s1668
      %1674 = dma.vmem_to_hbm [thread:$0]  %s1669, 512, %s4, [#allocation10], 128, 128, 8
    $region33: #{tpu_custom_call.1} parent=1 // pred_fallthru
      _
    // Predicated region
    $region34: #{tpu_custom_call.1} parent=1 // pred_check
      _
    $region35: #{tpu_custom_call.1} parent=1 // pred_check_branch
      %1676 = sbr.rel (0) target = $region37
    $region36: #{tpu_custom_call.1} parent=1 // pred_region
      %1677 = dma.done [#allocation4], 512
    $region37: #{tpu_custom_call.1} parent=1 // pred_fallthru
      _
    // Predicated region
    $region38: #{tpu_custom_call.1} parent=1 // pred_check
      _
    $region39: #{tpu_custom_call.1} parent=1 // pred_check_branch
      %1679 = sbr.rel (0) target = $region41
    $region40: #{tpu_custom_call.1} parent=1 // pred_region
      %1680 = dma.done [#allocation10], 512
    $region41: #{tpu_custom_call.1} parent=1 // pred_fallthru
      _
    %1681 = vsyncpa [#allocation3], 1
    %1682 = vsyncpa [#allocation6], 1
    %1683 = vsyncpa [#allocation4], 1
    %1684 = vsyncpa [#allocation10], 1

</llo_original>
